<compile_context>
chip_gen: v5e
topology: v5e:2x2
jax: 0.10.0
libtpu: 0.0.40
codegen_flags: <defaults>
</compile_context>

<pallas_src>
import functools

import jax
import jax.numpy as jnp
import numpy as np
from jax import lax
from jax.experimental import pallas as pl
from jax.experimental.pallas import tpu as pltpu

EMB_SIZE = 128   # emb_size (== da of SelfAttentionLayer)
VOCAB    = 256   # conceptnet_len
TOPK     = 8
B, L     = 2, 8


# ---------------------------------------------------------------------------
# Fused kernel: gather -> logits -> top-k -> gather -> self-attention
# ---------------------------------------------------------------------------
def _encoder_kernel(tok_ref, w_ref, a_ref, b_ref, out_ref, *, topk):
    # tok_ref: (N, 1) int32   flattened token ids
    # w_ref:   (V, E) f32     conceptnet embedding table (resident in VMEM)
    # a_ref:   (E, E) f32     SelfAttentionLayer.a
    # b_ref:   (1, E) f32     SelfAttentionLayer.b, transposed to a lane row
    # out_ref: (N, E) f32
    N = out_ref.shape[0]
    V, E = w_ref.shape
    K = topk

    w = w_ref[...]                                               # (V, E)

    # ---- gather 1: emb = W[tok]  (one-hot MXU matmul) ----------------------
    vcol = lax.broadcasted_iota(jnp.int32, (N, V), 1)
    onehot_tok = (vcol == tok_ref[...]).astype(jnp.float32)      # (N, V)
    emb = lax.dot_general(onehot_tok, w, (((1,), (0,)), ((), ())),
                          preferred_element_type=jnp.float32)    # (N, E)

    # ---- logits = emb @ W^T (contract last dims; no wrapper-side W.T) -------
    logits = lax.dot_general(emb, w, (((1,), (1,)), ((), ())),
                             preferred_element_type=jnp.float32)  # (N, V)

    # softmax over V is strictly monotone -> top-k is taken directly on logits.

    # ---- top-k: K single-reduce argmax passes, emitted as an (N,K,V) one-hot
    kidx3 = lax.broadcasted_iota(jnp.int32, (N, K, V), 1)
    onehot_top = jnp.zeros((N, K, V), jnp.float32)
    s = logits
    for k in range(K):                                           # K=8 unrolled
        m = jnp.max(s, axis=-1, keepdims=True)                   # (N,1) lane max
        sel = s == m                                             # one lane / row
        onehot_top = jnp.where(kidx3 == k,
                               sel[:, None, :].astype(jnp.float32),
                               onehot_top)
        s = jnp.where(sel, -jnp.inf, s)                          # mask selected

    # ---- gather 2: h = W[topk]  as one (N*K, V) @ (V, E) MXU matmul ---------
    h2 = lax.dot_general(onehot_top.reshape(N * K, V), w,
                         (((1,), (0,)), ((), ())),
                         preferred_element_type=jnp.float32)      # (N*K, E)

    # ---- SelfAttentionLayer: scores = tanh(h @ a) . b -----------------------
    t = jnp.dot(h2.astype(jnp.bfloat16), a_ref[...].astype(jnp.bfloat16),
                preferred_element_type=jnp.float32)               # bf16 MXU, f32 acc
    t = jnp.tanh(t).reshape(N, K, E)                              # f32 EUP
    scores = jnp.sum(t * b_ref[...], axis=-1)                     # (N, K) lane-dense
    m = jnp.max(scores, axis=-1, keepdims=True)
    p = jnp.exp(scores - m)
    attn = p * pl.reciprocal(jnp.sum(p, axis=-1, keepdims=True), approx=True)
    h3 = h2.reshape(N, K, E)
    out_ref[...] = jnp.sum(attn[:, :, None] * h3, axis=1)         # (N, E)


def concept_net_encoder(text_vec, weight, a, b, topk):
    Bv, Lv = text_vec.shape
    V, E = weight.shape
    N = Bv * Lv
    tok = text_vec.reshape(N, 1).astype(jnp.int32)
    b_row = b.reshape(1, E)

    out = pl.pallas_call(
        functools.partial(_encoder_kernel, topk=topk),
        out_shape=jax.ShapeDtypeStruct((N, E), jnp.float32),
        grid=(1,),   # N=16, V=256 fit a single block; see TODOs for scaling
        in_specs=[pl.BlockSpec((N, 1), lambda i: (0, 0)),
                  pl.BlockSpec((V, E), lambda i: (0, 0)),
                  pl.BlockSpec((E, E), lambda i: (0, 0)),
                  pl.BlockSpec((1, E), lambda i: (0, 0))],
        out_specs=pl.BlockSpec((N, E), lambda i: (0, 0)),
        compiler_params=pltpu.CompilerParams(
            dimension_semantics=("arbitrary",)),
    )(tok, weight, a, b_row)
    return out.reshape(Bv, Lv, E)


# ---------------------------------------------------------------------------
# Pure-JAX reference mirroring the PyTorch module, for correctness checking.
# ---------------------------------------------------------------------------
def reference(text_vec, weight, a, b, topk):
    emb = weight[text_vec]                                        # (B, L, E)
    match = jax.nn.softmax(jnp.einsum('ble,ve->blv', emb, weight), axis=-1)
    _, idx = jax.lax.top_k(match, topk)                           # (B, L, K)
    h = weight[idx]                                               # (B, L, K, E)
    e = jnp.matmul(jnp.tanh(jnp.matmul(h, a)), b)                 # (B, L, K, 1)
    e = jnp.swapaxes(e, -1, -2)                                   # (B, L, 1, K)
    attn = jax.nn.softmax(e, axis=-1)
    return jnp.matmul(attn, h)[..., 0, :]                         # (B, L, E)


if __name__ == "__main__":
    key = jax.random.PRNGKey(0)
    k1, k2, k3, k4 = jax.random.split(key, 4)

    def bf16_exact(x):
        # Snap to bf16-representable f32 so MXU products are exact on every
        # generation; makes the top-k comparison precision-robust.
        return x.astype(jnp.bfloat16).astype(jnp.float32)

    # Pretrained numberbatch rows are ~unit-norm: scale the random table by
    # 1/sqrt(E).  (Unscaled N(0,1) rows saturate the match softmax into exact
    # 0.0 ties, making top-k index choice arbitrary — the previous failure.)
    weight = bf16_exact(
        jax.random.normal(k1, (VOCAB, EMB_SIZE), dtype=jnp.float32)
        / float(np.sqrt(EMB_SIZE)))

    # xavier_uniform_ with gain=1.414 for a (dim, da) and b (da, 1)
    gain = 1.414
    bound_a = gain * np.sqrt(6.0 / (EMB_SIZE + EMB_SIZE))
    bound_b = gain * np.sqrt(6.0 / (EMB_SIZE + 1))
    a = bf16_exact(jax.random.uniform(
        k2, (EMB_SIZE, EMB_SIZE), minval=-bound_a, maxval=bound_a,
        dtype=jnp.float32))
    b = bf16_exact(jax.random.uniform(
        k3, (EMB_SIZE, 1), minval=-bound_b, maxval=bound_b,
        dtype=jnp.float32))

    # conceptnet_text_vec: integer token indices
    text_vec = jax.random.randint(k4, (B, L), 0, VOCAB, dtype=jnp.int32)

    out = concept_net_encoder(text_vec, weight, a, b, TOPK)
    out = jax.block_until_ready(out)

    ref = reference(text_vec, weight, a, b, TOPK)
    # Tolerance covers the bf16 MXU score path and the approx reciprocal in
    # the softmax; top-k index selection itself matches exactly.
    np.testing.assert_allclose(np.asarray(out), np.asarray(ref),
                               atol=1e-2, rtol=1e-2)
    print("KERNEL_OK")
</pallas_src>

<mosaic_0001>
module attributes {stable_mosaic.version = 11 : i64} {
  func.func @_encoder_kernel(%arg0: i32, %arg1: memref<16x1xi32, #tpu.memory_space<vmem>>, %arg2: memref<256x128xf32, #tpu.memory_space<vmem>>, %arg3: memref<128x128xf32, #tpu.memory_space<vmem>>, %arg4: memref<1x128xf32, #tpu.memory_space<vmem>>, %arg5: memref<16x128xf32, #tpu.memory_space<vmem>>) attributes {dimension_semantics = [#tpu.dimension_semantics<arbitrary>], iteration_bounds = array<i64: 1>, scalar_prefetch = 0 : i64, scratch_operands = 0 : i64, tpu.core_type = #tpu.core_type<tc>, window_params = [{pipeline_mode = #tpu.pipeline_mode<synchronous>, transform_indices = @transform_0, window_bounds = array<i64: 16, 1>}, {pipeline_mode = #tpu.pipeline_mode<synchronous>, transform_indices = @transform_1, window_bounds = array<i64: 256, 128>}, {pipeline_mode = #tpu.pipeline_mode<synchronous>, transform_indices = @transform_2, window_bounds = array<i64: 128, 128>}, {pipeline_mode = #tpu.pipeline_mode<synchronous>, transform_indices = @transform_3, window_bounds = array<i64: 1, 128>}, {pipeline_mode = #tpu.pipeline_mode<synchronous>, transform_indices = @transform_4, window_bounds = array<i64: 16, 128>}]} {
    %c0 = arith.constant 0 : index
    %c0_0 = arith.constant 0 : index
    %0 = vector.load %arg2[%c0, %c0_0] : memref<256x128xf32, #tpu.memory_space<vmem>>, vector<256x128xf32>
    %1 = tpu.iota {dimensions = array<i32: 1>} : vector<16x256xi32>
    %c0_1 = arith.constant 0 : index
    %c0_2 = arith.constant 0 : index
    %2 = vector.load %arg1[%c0_1, %c0_2] : memref<16x1xi32, #tpu.memory_space<vmem>>, vector<16x1xi32>
    %3 = vector.broadcast %2 : vector<16x1xi32> to vector<16x256xi32>
    %4 = arith.cmpi eq, %1, %3 : vector<16x256xi32>
    %5 = arith.extui %4 : vector<16x256xi1> to vector<16x256xi32>
    %6 = arith.sitofp %5 : vector<16x256xi32> to vector<16x256xf32>
    %cst = arith.constant dense<0.000000e+00> : vector<16x128xf32>
    %7 = tpu.matmul %6, %0, %cst {dimension_numbers = #tpu.dot_dimension_numbers<[1], [0], [0], [1], [0, 0, 1, 1], [], []>} : vector<16x256xf32>, vector<256x128xf32>, vector<16x128xf32> -> vector<16x128xf32>
    %cst_3 = arith.constant dense<0.000000e+00> : vector<16x256xf32>
    %8 = tpu.matmul %7, %0, %cst_3 {dimension_numbers = #tpu.dot_dimension_numbers<[1], [1], [0], [0], [0, 0, 1, 0], [], []>} : vector<16x128xf32>, vector<256x128xf32>, vector<16x256xf32> -> vector<16x256xf32>
    %9 = tpu.iota {dimensions = array<i32: 1>} : vector<16x8x256xi32>
    %cst_4 = arith.constant 0.000000e+00 : f32
    %10 = vector.broadcast %cst_4 : f32 to vector<16x8x256xf32>
    %cst_5 = arith.constant dense<0xFF800000> : vector<16xf32>
    %11 = vector.multi_reduction <maximumf>, %8, %cst_5 [1] : vector<16x256xf32> to vector<16xf32>
    %12 = vector.shape_cast %11 : vector<16xf32> to vector<16x1xf32>
    %13 = vector.broadcast %12 : vector<16x1xf32> to vector<16x256xf32>
    %14 = arith.cmpf oeq, %8, %13 : vector<16x256xf32>
    %c0_i32 = arith.constant 0 : i32
    %15 = vector.broadcast %c0_i32 : i32 to vector<16x8x256xi32>
    %16 = arith.cmpi eq, %9, %15 : vector<16x8x256xi32>
    %17 = vector.shape_cast %14 : vector<16x256xi1> to vector<16x1x256xi1>
    %18 = arith.extui %17 : vector<16x1x256xi1> to vector<16x1x256xi32>
    %19 = arith.sitofp %18 : vector<16x1x256xi32> to vector<16x1x256xf32>
    %20 = vector.shape_cast %19 : vector<16x1x256xf32> to vector<16x1x256xf32>
    %21 = vector.broadcast %20 : vector<16x1x256xf32> to vector<16x8x256xf32>
    %22 = arith.select %16, %21, %10 : vector<16x8x256xi1>, vector<16x8x256xf32>
    %cst_6 = arith.constant 0xFF800000 : f32
    %23 = vector.broadcast %cst_6 : f32 to vector<16x256xf32>
    %24 = arith.select %14, %23, %8 : vector<16x256xi1>, vector<16x256xf32>
    %cst_7 = arith.constant dense<0xFF800000> : vector<16xf32>
    %25 = vector.multi_reduction <maximumf>, %24, %cst_7 [1] : vector<16x256xf32> to vector<16xf32>
    %26 = vector.shape_cast %25 : vector<16xf32> to vector<16x1xf32>
    %27 = vector.broadcast %26 : vector<16x1xf32> to vector<16x256xf32>
    %28 = arith.cmpf oeq, %24, %27 : vector<16x256xf32>
    %c1_i32 = arith.constant 1 : i32
    %29 = vector.broadcast %c1_i32 : i32 to vector<16x8x256xi32>
    %30 = arith.cmpi eq, %9, %29 : vector<16x8x256xi32>
    %31 = vector.shape_cast %28 : vector<16x256xi1> to vector<16x1x256xi1>
    %32 = arith.extui %31 : vector<16x1x256xi1> to vector<16x1x256xi32>
    %33 = arith.sitofp %32 : vector<16x1x256xi32> to vector<16x1x256xf32>
    %34 = vector.shape_cast %33 : vector<16x1x256xf32> to vector<16x1x256xf32>
    %35 = vector.broadcast %34 : vector<16x1x256xf32> to vector<16x8x256xf32>
    %36 = arith.select %30, %35, %22 : vector<16x8x256xi1>, vector<16x8x256xf32>
    %cst_8 = arith.constant 0xFF800000 : f32
    %37 = vector.broadcast %cst_8 : f32 to vector<16x256xf32>
    %38 = arith.select %28, %37, %24 : vector<16x256xi1>, vector<16x256xf32>
    %cst_9 = arith.constant dense<0xFF800000> : vector<16xf32>
    %39 = vector.multi_reduction <maximumf>, %38, %cst_9 [1] : vector<16x256xf32> to vector<16xf32>
    %40 = vector.shape_cast %39 : vector<16xf32> to vector<16x1xf32>
    %41 = vector.broadcast %40 : vector<16x1xf32> to vector<16x256xf32>
    %42 = arith.cmpf oeq, %38, %41 : vector<16x256xf32>
    %c2_i32 = arith.constant 2 : i32
    %43 = vector.broadcast %c2_i32 : i32 to vector<16x8x256xi32>
    %44 = arith.cmpi eq, %9, %43 : vector<16x8x256xi32>
    %45 = vector.shape_cast %42 : vector<16x256xi1> to vector<16x1x256xi1>
    %46 = arith.extui %45 : vector<16x1x256xi1> to vector<16x1x256xi32>
    %47 = arith.sitofp %46 : vector<16x1x256xi32> to vector<16x1x256xf32>
    %48 = vector.shape_cast %47 : vector<16x1x256xf32> to vector<16x1x256xf32>
    %49 = vector.broadcast %48 : vector<16x1x256xf32> to vector<16x8x256xf32>
    %50 = arith.select %44, %49, %36 : vector<16x8x256xi1>, vector<16x8x256xf32>
    %cst_10 = arith.constant 0xFF800000 : f32
    %51 = vector.broadcast %cst_10 : f32 to vector<16x256xf32>
    %52 = arith.select %42, %51, %38 : vector<16x256xi1>, vector<16x256xf32>
    %cst_11 = arith.constant dense<0xFF800000> : vector<16xf32>
    %53 = vector.multi_reduction <maximumf>, %52, %cst_11 [1] : vector<16x256xf32> to vector<16xf32>
    %54 = vector.shape_cast %53 : vector<16xf32> to vector<16x1xf32>
    %55 = vector.broadcast %54 : vector<16x1xf32> to vector<16x256xf32>
    %56 = arith.cmpf oeq, %52, %55 : vector<16x256xf32>
    %c3_i32 = arith.constant 3 : i32
    %57 = vector.broadcast %c3_i32 : i32 to vector<16x8x256xi32>
    %58 = arith.cmpi eq, %9, %57 : vector<16x8x256xi32>
    %59 = vector.shape_cast %56 : vector<16x256xi1> to vector<16x1x256xi1>
    %60 = arith.extui %59 : vector<16x1x256xi1> to vector<16x1x256xi32>
    %61 = arith.sitofp %60 : vector<16x1x256xi32> to vector<16x1x256xf32>
    %62 = vector.shape_cast %61 : vector<16x1x256xf32> to vector<16x1x256xf32>
    %63 = vector.broadcast %62 : vector<16x1x256xf32> to vector<16x8x256xf32>
    %64 = arith.select %58, %63, %50 : vector<16x8x256xi1>, vector<16x8x256xf32>
    %cst_12 = arith.constant 0xFF800000 : f32
    %65 = vector.broadcast %cst_12 : f32 to vector<16x256xf32>
    %66 = arith.select %56, %65, %52 : vector<16x256xi1>, vector<16x256xf32>
    %cst_13 = arith.constant dense<0xFF800000> : vector<16xf32>
    %67 = vector.multi_reduction <maximumf>, %66, %cst_13 [1] : vector<16x256xf32> to vector<16xf32>
    %68 = vector.shape_cast %67 : vector<16xf32> to vector<16x1xf32>
    %69 = vector.broadcast %68 : vector<16x1xf32> to vector<16x256xf32>
    %70 = arith.cmpf oeq, %66, %69 : vector<16x256xf32>
    %c4_i32 = arith.constant 4 : i32
    %71 = vector.broadcast %c4_i32 : i32 to vector<16x8x256xi32>
    %72 = arith.cmpi eq, %9, %71 : vector<16x8x256xi32>
    %73 = vector.shape_cast %70 : vector<16x256xi1> to vector<16x1x256xi1>
    %74 = arith.extui %73 : vector<16x1x256xi1> to vector<16x1x256xi32>
    %75 = arith.sitofp %74 : vector<16x1x256xi32> to vector<16x1x256xf32>
    %76 = vector.shape_cast %75 : vector<16x1x256xf32> to vector<16x1x256xf32>
    %77 = vector.broadcast %76 : vector<16x1x256xf32> to vector<16x8x256xf32>
    %78 = arith.select %72, %77, %64 : vector<16x8x256xi1>, vector<16x8x256xf32>
    %cst_14 = arith.constant 0xFF800000 : f32
    %79 = vector.broadcast %cst_14 : f32 to vector<16x256xf32>
    %80 = arith.select %70, %79, %66 : vector<16x256xi1>, vector<16x256xf32>
    %cst_15 = arith.constant dense<0xFF800000> : vector<16xf32>
    %81 = vector.multi_reduction <maximumf>, %80, %cst_15 [1] : vector<16x256xf32> to vector<16xf32>
    %82 = vector.shape_cast %81 : vector<16xf32> to vector<16x1xf32>
    %83 = vector.broadcast %82 : vector<16x1xf32> to vector<16x256xf32>
    %84 = arith.cmpf oeq, %80, %83 : vector<16x256xf32>
    %c5_i32 = arith.constant 5 : i32
    %85 = vector.broadcast %c5_i32 : i32 to vector<16x8x256xi32>
    %86 = arith.cmpi eq, %9, %85 : vector<16x8x256xi32>
    %87 = vector.shape_cast %84 : vector<16x256xi1> to vector<16x1x256xi1>
    %88 = arith.extui %87 : vector<16x1x256xi1> to vector<16x1x256xi32>
    %89 = arith.sitofp %88 : vector<16x1x256xi32> to vector<16x1x256xf32>
    %90 = vector.shape_cast %89 : vector<16x1x256xf32> to vector<16x1x256xf32>
    %91 = vector.broadcast %90 : vector<16x1x256xf32> to vector<16x8x256xf32>
    %92 = arith.select %86, %91, %78 : vector<16x8x256xi1>, vector<16x8x256xf32>
    %cst_16 = arith.constant 0xFF800000 : f32
    %93 = vector.broadcast %cst_16 : f32 to vector<16x256xf32>
    %94 = arith.select %84, %93, %80 : vector<16x256xi1>, vector<16x256xf32>
    %cst_17 = arith.constant dense<0xFF800000> : vector<16xf32>
    %95 = vector.multi_reduction <maximumf>, %94, %cst_17 [1] : vector<16x256xf32> to vector<16xf32>
    %96 = vector.shape_cast %95 : vector<16xf32> to vector<16x1xf32>
    %97 = vector.broadcast %96 : vector<16x1xf32> to vector<16x256xf32>
    %98 = arith.cmpf oeq, %94, %97 : vector<16x256xf32>
    %c6_i32 = arith.constant 6 : i32
    %99 = vector.broadcast %c6_i32 : i32 to vector<16x8x256xi32>
    %100 = arith.cmpi eq, %9, %99 : vector<16x8x256xi32>
    %101 = vector.shape_cast %98 : vector<16x256xi1> to vector<16x1x256xi1>
    %102 = arith.extui %101 : vector<16x1x256xi1> to vector<16x1x256xi32>
    %103 = arith.sitofp %102 : vector<16x1x256xi32> to vector<16x1x256xf32>
    %104 = vector.shape_cast %103 : vector<16x1x256xf32> to vector<16x1x256xf32>
    %105 = vector.broadcast %104 : vector<16x1x256xf32> to vector<16x8x256xf32>
    %106 = arith.select %100, %105, %92 : vector<16x8x256xi1>, vector<16x8x256xf32>
    %cst_18 = arith.constant 0xFF800000 : f32
    %107 = vector.broadcast %cst_18 : f32 to vector<16x256xf32>
    %108 = arith.select %98, %107, %94 : vector<16x256xi1>, vector<16x256xf32>
    %cst_19 = arith.constant dense<0xFF800000> : vector<16xf32>
    %109 = vector.multi_reduction <maximumf>, %108, %cst_19 [1] : vector<16x256xf32> to vector<16xf32>
    %110 = vector.shape_cast %109 : vector<16xf32> to vector<16x1xf32>
    %111 = vector.broadcast %110 : vector<16x1xf32> to vector<16x256xf32>
    %112 = arith.cmpf oeq, %108, %111 : vector<16x256xf32>
    %c7_i32 = arith.constant 7 : i32
    %113 = vector.broadcast %c7_i32 : i32 to vector<16x8x256xi32>
    %114 = arith.cmpi eq, %9, %113 : vector<16x8x256xi32>
    %115 = vector.shape_cast %112 : vector<16x256xi1> to vector<16x1x256xi1>
    %116 = arith.extui %115 : vector<16x1x256xi1> to vector<16x1x256xi32>
    %117 = arith.sitofp %116 : vector<16x1x256xi32> to vector<16x1x256xf32>
    %118 = vector.shape_cast %117 : vector<16x1x256xf32> to vector<16x1x256xf32>
    %119 = vector.broadcast %118 : vector<16x1x256xf32> to vector<16x8x256xf32>
    %120 = arith.select %114, %119, %106 : vector<16x8x256xi1>, vector<16x8x256xf32>
    %121 = vector.shape_cast %120 : vector<16x8x256xf32> to vector<128x256xf32>
    %cst_20 = arith.constant dense<0.000000e+00> : vector<128x128xf32>
    %122 = tpu.matmul %121, %0, %cst_20 {dimension_numbers = #tpu.dot_dimension_numbers<[1], [0], [0], [1], [0, 0, 1, 1], [], []>} : vector<128x256xf32>, vector<256x128xf32>, vector<128x128xf32> -> vector<128x128xf32>
    %123 = arith.truncf %122 : vector<128x128xf32> to vector<128x128xbf16>
    %c0_21 = arith.constant 0 : index
    %c0_22 = arith.constant 0 : index
    %124 = vector.load %arg3[%c0_21, %c0_22] : memref<128x128xf32, #tpu.memory_space<vmem>>, vector<128x128xf32>
    %125 = arith.truncf %124 : vector<128x128xf32> to vector<128x128xbf16>
    %cst_23 = arith.constant dense<0.000000e+00> : vector<128x128xf32>
    %126 = tpu.matmul %123, %125, %cst_23 {dimension_numbers = #tpu.dot_dimension_numbers<[1], [0], [0], [1], [0, 0, 1, 1], [], []>} : vector<128x128xbf16>, vector<128x128xbf16>, vector<128x128xf32> -> vector<128x128xf32>
    %127 = math.tanh %126 : vector<128x128xf32>
    %128 = vector.shape_cast %127 : vector<128x128xf32> to vector<16x8x128xf32>
    %c0_24 = arith.constant 0 : index
    %c0_25 = arith.constant 0 : index
    %129 = vector.load %arg4[%c0_24, %c0_25] : memref<1x128xf32, #tpu.memory_space<vmem>>, vector<1x128xf32>
    %130 = vector.shape_cast %129 : vector<1x128xf32> to vector<1x1x128xf32>
    %131 = vector.broadcast %130 : vector<1x1x128xf32> to vector<16x8x128xf32>
    %132 = arith.mulf %128, %131 : vector<16x8x128xf32>
    %cst_26 = arith.constant dense<0.000000e+00> : vector<16x8xf32>
    %133 = vector.multi_reduction <add>, %132, %cst_26 [2] : vector<16x8x128xf32> to vector<16x8xf32>
    %cst_27 = arith.constant dense<0xFF800000> : vector<16xf32>
    %134 = vector.multi_reduction <maximumf>, %133, %cst_27 [1] : vector<16x8xf32> to vector<16xf32>
    %135 = vector.shape_cast %134 : vector<16xf32> to vector<16x1xf32>
    %136 = vector.broadcast %135 : vector<16x1xf32> to vector<16x8xf32>
    %137 = arith.subf %133, %136 : vector<16x8xf32>
    %138 = math.exp %137 : vector<16x8xf32>
    %cst_28 = arith.constant dense<0.000000e+00> : vector<16xf32>
    %139 = vector.multi_reduction <add>, %138, %cst_28 [1] : vector<16x8xf32> to vector<16xf32>
    %140 = vector.shape_cast %139 : vector<16xf32> to vector<16x1xf32>
    %141 = tpu.reciprocal %140 {approx = true} : vector<16x1xf32> -> vector<16x1xf32>
    %142 = vector.broadcast %141 : vector<16x1xf32> to vector<16x8xf32>
    %143 = arith.mulf %138, %142 : vector<16x8xf32>
    %144 = vector.shape_cast %122 : vector<128x128xf32> to vector<16x8x128xf32>
    %145 = vector.shape_cast %143 : vector<16x8xf32> to vector<16x8x1xf32>
    %146 = vector.broadcast %145 : vector<16x8x1xf32> to vector<16x8x128xf32>
    %147 = arith.mulf %146, %144 : vector<16x8x128xf32>
    %cst_29 = arith.constant dense<0.000000e+00> : vector<16x128xf32>
    %148 = vector.multi_reduction <add>, %147, %cst_29 [1] : vector<16x8x128xf32> to vector<16x128xf32>
    %c0_30 = arith.constant 0 : index
    %c0_31 = arith.constant 0 : index
    %149 = vector.load %arg5[%c0_30, %c0_31] : memref<16x128xf32, #tpu.memory_space<vmem>>, vector<16x128xf32>
    tpu.vector_store %arg5[%c0_30, %c0_31], %148 {strides = array<i32>} : memref<16x128xf32, #tpu.memory_space<vmem>>, vector<16x128xf32>,
    return
  }
  func.func @transform_0(%arg0: i32) -> (i32, i32) {
    %c0_i32 = arith.constant 0 : i32
    %c0_i32_0 = arith.constant 0 : i32
    %c0_i32_1 = arith.constant 0 : i32
    return %c0_i32, %c0_i32_0 : i32, i32
  }
  func.func @transform_1(%arg0: i32) -> (i32, i32) {
    %c0_i32 = arith.constant 0 : i32
    %c0_i32_0 = arith.constant 0 : i32
    %c0_i32_1 = arith.constant 0 : i32
    return %c0_i32, %c0_i32_0 : i32, i32
  }
  func.func @transform_2(%arg0: i32) -> (i32, i32) {
    %c0_i32 = arith.constant 0 : i32
    %c0_i32_0 = arith.constant 0 : i32
    %c0_i32_1 = arith.constant 0 : i32
    return %c0_i32, %c0_i32_0 : i32, i32
  }
  func.func @transform_3(%arg0: i32) -> (i32, i32) {
    %c0_i32 = arith.constant 0 : i32
    %c0_i32_0 = arith.constant 0 : i32
    %c0_i32_1 = arith.constant 0 : i32
    return %c0_i32, %c0_i32_0 : i32, i32
  }
  func.func @transform_4(%arg0: i32) -> (i32, i32) {
    %c0_i32 = arith.constant 0 : i32
    %c0_i32_0 = arith.constant 0 : i32
    %c0_i32_1 = arith.constant 0 : i32
    return %c0_i32, %c0_i32_0 : i32, i32
  }
}

</mosaic_0001>

<llo_original>
// kernel: tpu_custom_call.1
$region0: #{tpu_custom_call.1}
  #allocation0 [shape = 'u32[]', space=smem, size = 0x4, offset = 0x4, fixed_abs, tag = 'smem constant byte address 0x4 - core index']
  #allocation1 [shape = 'u32[72,128]{1,0:T(1,128)}', space=vmem, size = 0x9000, scoped, tag = 'internal scratch']
  %s0 = inlined_call_operand.vmem [shape: s32[16,1], index: 0, kind: input, shape index: {}]
  %s1 = inlined_call_operand.hbm [shape: f32[256,128], index: 1, kind: input, shape index: {}]
  %s2 = inlined_call_operand.hbm [shape: f32[128,128], index: 2, kind: input, shape index: {}]
  %s3 = inlined_call_operand.vmem [shape: f32[1,128], index: 3, kind: input, shape index: {}]
  %s4 = inlined_call_operand.hbm [shape: f32[16,128], index: 4, kind: output, shape index: {}]
  %s5 = sld [smem:[#allocation0]]
  $region34: #{tpu_custom_call.1} parent=0
    _
  %s7 = ssub.s32 1, %s5
  %s8 = scalar_select 0, %s7, %s5
  $region1: #{tpu_custom_call.1} parent=0
    #allocation2 [shape = 'u8[131072]{0}', space=vmem, size = 0x20000, scoped, tag = 'input window, operand 1, single buffered']
    #allocation3 [shape = 's32[1]{0}', space=sflag, size = 0x4, scoped, tag = 'scoped memory for tpu_custom_call.1']
    #allocation4 [shape = 's32[1]{0}', space=sflag, size = 0x4, scoped, tag = 'scoped memory for tpu_custom_call.1']
    #allocation5 [shape = 'u8[65536]{0}', space=vmem, size = 0x10000, scoped, tag = 'input window, operand 2, single buffered']
    #allocation6 [shape = 's32[1]{0}', space=sflag, size = 0x4, scoped, tag = 'scoped memory for tpu_custom_call.1']
    #allocation7 [shape = 'u8[8192]{0}', space=vmem, size = 0x2000, scoped, tag = 'output window, operand 0, single buffered']
    %9 = vsyncpa [#allocation3], 0
    %10 = vsyncpa [#allocation6], 0
    %11 = vsyncpa [#allocation4], 0
    // Predicated region
    $region2: #{tpu_custom_call.1} parent=1 // pred_check
      _
    $region3: #{tpu_custom_call.1} parent=1 // pred_check_branch
      %13 = sbr.rel (0) target = $region5
    $region4: #{tpu_custom_call.1} parent=1 // pred_region
      _
    $region5: #{tpu_custom_call.1} parent=1 // pred_fallthru
      _
    // Predicated region
    $region6: #{tpu_custom_call.1} parent=1 // pred_check
      _
    $region7: #{tpu_custom_call.1} parent=1 // pred_check_branch
      %15 = sbr.rel (0) target = $region9
    $region8: #{tpu_custom_call.1} parent=1 // pred_region
      %17 = vsyncadd [#allocation3], 0
      %s18 = sshll.u32 %s1, 4
      %s19 = int_to_ptr.hbm [resolvable:$true] %s18
      %s20 = sshll.u32 [#allocation2], 4
      %s21 = int_to_ptr.vmem [resolvable:$true] %s20
      %26 = dma.hbm_to_vmem [thread:$0]  %s19, 4096, %s21, [#allocation3], 128, 128, 8
    $region9: #{tpu_custom_call.1} parent=1 // pred_fallthru
      _
    // Predicated region
    $region10: #{tpu_custom_call.1} parent=1 // pred_check
      _
    $region11: #{tpu_custom_call.1} parent=1 // pred_check_branch
      %28 = sbr.rel (0) target = $region13
    $region12: #{tpu_custom_call.1} parent=1 // pred_region
      %30 = vsyncadd [#allocation6], 0
      %s31 = sshll.u32 %s2, 4
      %s32 = int_to_ptr.hbm [resolvable:$true] %s31
      %s33 = sshll.u32 [#allocation5], 4
      %s34 = int_to_ptr.vmem [resolvable:$true] %s33
      %39 = dma.hbm_to_vmem [thread:$0]  %s32, 2048, %s34, [#allocation6], 128, 128, 8
    $region13: #{tpu_custom_call.1} parent=1 // pred_fallthru
      _
    // Predicated region
    $region14: #{tpu_custom_call.1} parent=1 // pred_check
      _
    $region15: #{tpu_custom_call.1} parent=1 // pred_check_branch
      %41 = sbr.rel (0) target = $region17
    $region16: #{tpu_custom_call.1} parent=1 // pred_region
      _
    $region17: #{tpu_custom_call.1} parent=1 // pred_fallthru
      _
    // Predicated region
    $region18: #{tpu_custom_call.1} parent=1 // pred_check
      _
    $region19: #{tpu_custom_call.1} parent=1 // pred_check_branch
      %43 = sbr.rel (0) target = $region21
    $region20: #{tpu_custom_call.1} parent=1 // pred_region
      %45 = dma.done [#allocation3], 4096
    $region21: #{tpu_custom_call.1} parent=1 // pred_fallthru
      _
    // Predicated region
    $region22: #{tpu_custom_call.1} parent=1 // pred_check
      _
    $region23: #{tpu_custom_call.1} parent=1 // pred_check_branch
      %47 = sbr.rel (0) target = $region25
    $region24: #{tpu_custom_call.1} parent=1 // pred_region
      %49 = dma.done [#allocation6], 2048
    $region25: #{tpu_custom_call.1} parent=1 // pred_fallthru
      _
    %v50 = vld [vmem:[#allocation2] sm:$0xff]
    %v51 = vld [vmem:[#allocation2 + $0x8] sm:$0xff]
    %v52 = vld [vmem:[#allocation2 + $0x10] sm:$0xff]
    %v53 = vld [vmem:[#allocation2 + $0x18] sm:$0xff]
    %v54 = vld [vmem:[#allocation2 + $0x20] sm:$0xff]
    %v55 = vld [vmem:[#allocation2 + $0x28] sm:$0xff]
    %v56 = vld [vmem:[#allocation2 + $0x30] sm:$0xff]
    %v57 = vld [vmem:[#allocation2 + $0x38] sm:$0xff]
    %v58 = vld [vmem:[#allocation2 + $0x40] sm:$0xff]
    %v59 = vld [vmem:[#allocation2 + $0x48] sm:$0xff]
    %v60 = vld [vmem:[#allocation2 + $0x50] sm:$0xff]
    %v61 = vld [vmem:[#allocation2 + $0x58] sm:$0xff]
    %v62 = vld [vmem:[#allocation2 + $0x60] sm:$0xff]
    %v63 = vld [vmem:[#allocation2 + $0x68] sm:$0xff]
    %v64 = vld [vmem:[#allocation2 + $0x70] sm:$0xff]
    %v65 = vld [vmem:[#allocation2 + $0x78] sm:$0xff]
    %v66 = vld [vmem:[#allocation2 + $0x80] sm:$0xff]
    %v67 = vld [vmem:[#allocation2 + $0x88] sm:$0xff]
    %v68 = vld [vmem:[#allocation2 + $0x90] sm:$0xff]
    %v69 = vld [vmem:[#allocation2 + $0x98] sm:$0xff]
    %v70 = vld [vmem:[#allocation2 + $0xa0] sm:$0xff]
    %v71 = vld [vmem:[#allocation2 + $0xa8] sm:$0xff]
    %v72 = vld [vmem:[#allocation2 + $0xb0] sm:$0xff]
    %v73 = vld [vmem:[#allocation2 + $0xb8] sm:$0xff]
    %v74 = vld [vmem:[#allocation2 + $0xc0] sm:$0xff]
    %v75 = vld [vmem:[#allocation2 + $0xc8] sm:$0xff]
    %v76 = vld [vmem:[#allocation2 + $0xd0] sm:$0xff]
    %v77 = vld [vmem:[#allocation2 + $0xd8] sm:$0xff]
    %v78 = vld [vmem:[#allocation2 + $0xe0] sm:$0xff]
    %v79 = vld [vmem:[#allocation2 + $0xe8] sm:$0xff]
    %v80 = vld [vmem:[#allocation2 + $0xf0] sm:$0xff]
    %v81 = vld [vmem:[#allocation2 + $0xf8] sm:$0xff]
    %v82 = vlaneseq
    %v83 = vand.u32 %v82, 127
    %v84 = vadd.s32 %v83, 128
    %v85 = vld [vmem:[%s0] sm:$0xff]
    %v86 = vld [vmem:[%s0 + $0x8] sm:$0xff]
    %87 = vset.pattern.permute.xlu0 0
    %88 = vperm.xlu0 %87, %v85
    %v89 = vpop.permute.xlu0 %88
    %90 = vset.pattern.permute.xlu0 0
    %91 = vperm.xlu0 %90, %v86
    %v92 = vpop.permute.xlu0 %91
    %vm93 = vcmp.eq.s32.totalorder %v83, %v89
    %vm94 = vcmp.eq.s32.totalorder %v84, %v89
    %vm95 = vcmp.eq.s32.totalorder %v83, %v92
    %vm96 = vcmp.eq.s32.totalorder %v84, %v92
    %v97 = vsel %vm93, 1, 0
    %v98 = vsel %vm94, 1, 0
    %v99 = vsel %vm95, 1, 0
    %v100 = vsel %vm96, 1, 0
    %v101 = vcvt.s32.f32 %v97
    %v102 = vcvt.s32.f32 %v98
    %v103 = vcvt.s32.f32 %v99
    %v104 = vcvt.s32.f32 %v100
    %105 = vmatpush.msra.mxu0 %v65
    %106 = vmatpush.msra.mxu0 %v64
    %107 = vmatpush.msra.mxu0 %v63
    %108 = vmatpush.msra.mxu0 %v62
    %109 = vmatpush.msra.mxu0 %v61
    %110 = vmatpush.msra.mxu0 %v60
    %111 = vmatpush.msra.mxu0 %v59
    %112 = vmatpush.msra.mxu0 %v58
    %113 = vmatpush.msra.mxu0 %v57
    %114 = vmatpush.msra.mxu0 %v56
    %115 = vmatpush.msra.mxu0 %v55
    %116 = vmatpush.msra.mxu0 %v54
    %117 = vmatpush.msra.mxu0 %v53
    %118 = vmatpush.msra.mxu0 %v52
    %119 = vmatpush.msra.mxu0 %v51
    %120 = vmatpush.msra.mxu0 %v50
    %121 = vmatmul.f32.gmra.mxu0 %v101
    %v122 = vpop.f32.mrf.mxu0
    %v123 = vadd.f32 0.0, %v122
    %124 = vmatmul.f32.gmra.mxu0 %v103
    %v125 = vpop.f32.mrf.mxu0
    %v126 = vadd.f32 0.0, %v125
    %127 = vdwg.mxu0
    %128 = vmatpush.msra.mxu0 %v81
    %129 = vmatpush.msra.mxu0 %v80
    %130 = vmatpush.msra.mxu0 %v79
    %131 = vmatpush.msra.mxu0 %v78
    %132 = vmatpush.msra.mxu0 %v77
    %133 = vmatpush.msra.mxu0 %v76
    %134 = vmatpush.msra.mxu0 %v75
    %135 = vmatpush.msra.mxu0 %v74
    %136 = vmatpush.msra.mxu0 %v73
    %137 = vmatpush.msra.mxu0 %v72
    %138 = vmatpush.msra.mxu0 %v71
    %139 = vmatpush.msra.mxu0 %v70
    %140 = vmatpush.msra.mxu0 %v69
    %141 = vmatpush.msra.mxu0 %v68
    %142 = vmatpush.msra.mxu0 %v67
    %143 = vmatpush.msra.mxu0 %v66
    %144 = vmatmul.f32.gmra.mxu0 %v102
    %v145 = vpop.f32.mrf.mxu0
    %v146 = vadd.f32 %v123, %v145
    %147 = vmatmul.f32.gmra.mxu0 %v104
    %v148 = vpop.f32.mrf.mxu0
    %v149 = vadd.f32 %v126, %v148
    %150 = vdwg.mxu0
    %151 = vmatpush.xpose.msra.mxu0 %v65
    %152 = vmatpush.xpose.msra.mxu0 %v64
    %153 = vmatpush.xpose.msra.mxu0 %v63
    %154 = vmatpush.xpose.msra.mxu0 %v62
    %155 = vmatpush.xpose.msra.mxu0 %v61
    %156 = vmatpush.xpose.msra.mxu0 %v60
    %157 = vmatpush.xpose.msra.mxu0 %v59
    %158 = vmatpush.xpose.msra.mxu0 %v58
    %159 = vmatpush.xpose.msra.mxu0 %v57
    %160 = vmatpush.xpose.msra.mxu0 %v56
    %161 = vmatpush.xpose.msra.mxu0 %v55
    %162 = vmatpush.xpose.msra.mxu0 %v54
    %163 = vmatpush.xpose.msra.mxu0 %v53
    %164 = vmatpush.xpose.msra.mxu0 %v52
    %165 = vmatpush.xpose.msra.mxu0 %v51
    %166 = vmatpush.xpose.msra.mxu0 %v50
    %167 = vmatmul.f32.gmra.mxu0 %v146
    %v168 = vpop.f32.mrf.mxu0
    %v169 = vadd.f32 0.0, %v168
    %170 = vmatmul.f32.gmra.mxu0 %v149
    %v171 = vpop.f32.mrf.mxu0
    %v172 = vadd.f32 0.0, %v171
    %173 = vdwg.mxu0
    %174 = vmatpush.xpose.msra.mxu0 %v81
    %175 = vmatpush.xpose.msra.mxu0 %v80
    %176 = vmatpush.xpose.msra.mxu0 %v79
    %177 = vmatpush.xpose.msra.mxu0 %v78
    %178 = vmatpush.xpose.msra.mxu0 %v77
    %179 = vmatpush.xpose.msra.mxu0 %v76
    %180 = vmatpush.xpose.msra.mxu0 %v75
    %181 = vmatpush.xpose.msra.mxu0 %v74
    %182 = vmatpush.xpose.msra.mxu0 %v73
    %183 = vmatpush.xpose.msra.mxu0 %v72
    %184 = vmatpush.xpose.msra.mxu0 %v71
    %185 = vmatpush.xpose.msra.mxu0 %v70
    %186 = vmatpush.xpose.msra.mxu0 %v69
    %187 = vmatpush.xpose.msra.mxu0 %v68
    %188 = vmatpush.xpose.msra.mxu0 %v67
    %189 = vmatpush.xpose.msra.mxu0 %v66
    %190 = vmatmul.f32.gmra.mxu0 %v146
    %v191 = vpop.f32.mrf.mxu0
    %v192 = vadd.f32 0.0, %v191
    %193 = vmatmul.f32.gmra.mxu0 %v149
    %v194 = vpop.f32.mrf.mxu0
    %v195 = vadd.f32 0.0, %v194
    %196 = vdwg.mxu0
    %v197 = vlaneseq
    %v198 = vshrl.u32 %v197, 7
    %v199 = vmax.f32 %v169, %v192
    %200 = vmax.xlane.f32.xlu0 %v199
    %v201 = vpop.xlane.xlu0 %200
    %v202 = vmax.f32 %v172, %v195
    %203 = vmax.xlane.f32.xlu0 %v202
    %v204 = vpop.xlane.xlu0 %203
    %vm205 = vcmp.eq.f32.partialorder %v169, %v201
    %vm206 = vcmp.eq.f32.partialorder %v192, %v201
    %vm207 = vcmp.eq.f32.partialorder %v172, %v204
    %vm208 = vcmp.eq.f32.partialorder %v195, %v204
    %vm209 = vcmp.eq.s32.totalorder %v198, 0
    %v210 = vsel %vm205, 1, 0
    %v211 = vsel %vm206, 1, 0
    %v212 = vsel %vm207, 1, 0
    %v213 = vsel %vm208, 1, 0
    %v214 = vrot.slane %v211, 7
    %v215 = vrot.slane %v213, 7
    %vm216 = vcmask 1040384
    %v217 = vsel %vm216, %v210, %v214
    %vm218 = vcmask 1041409
    %v219 = vsel %vm218, %v210, %v214
    %v220 = vrot.slane %v219, 1
    %vm221 = vcmask 1042434
    %v222 = vsel %vm221, %v210, %v214
    %v223 = vrot.slane %v222, 2
    %vm224 = vcmask 1043459
    %v225 = vsel %vm224, %v210, %v214
    %v226 = vrot.slane %v225, 3
    %vm227 = vcmask 1044484
    %v228 = vsel %vm227, %v210, %v214
    %v229 = vrot.slane %v228, 4
    %vm230 = vcmask 1045509
    %v231 = vsel %vm230, %v210, %v214
    %v232 = vrot.slane %v231, 5
    %vm233 = vcmask 1046534
    %v234 = vsel %vm233, %v210, %v214
    %v235 = vrot.slane %v234, 6
    %vm236 = vcmask 1046528
    %v237 = vsel %vm236, %v214, %v210
    %v238 = vrot.slane %v237, 7
    %v239 = vsel %vm216, %v212, %v215
    %v240 = vsel %vm218, %v212, %v215
    %v241 = vrot.slane %v240, 1
    %v242 = vsel %vm221, %v212, %v215
    %v243 = vrot.slane %v242, 2
    %v244 = vsel %vm224, %v212, %v215
    %v245 = vrot.slane %v244, 3
    %v246 = vsel %vm227, %v212, %v215
    %v247 = vrot.slane %v246, 4
    %v248 = vsel %vm230, %v212, %v215
    %v249 = vrot.slane %v248, 5
    %v250 = vsel %vm233, %v212, %v215
    %v251 = vrot.slane %v250, 6
    %v252 = vsel %vm236, %v215, %v212
    %v253 = vrot.slane %v252, 7
    %vm254 = vcmp.ne.s32.totalorder %v217, 0
    %vm255 = vcmp.ne.s32.totalorder %v220, 0
    %vm256 = vcmp.ne.s32.totalorder %v223, 0
    %vm257 = vcmp.ne.s32.totalorder %v226, 0
    %vm258 = vcmp.ne.s32.totalorder %v229, 0
    %vm259 = vcmp.ne.s32.totalorder %v232, 0
    %vm260 = vcmp.ne.s32.totalorder %v235, 0
    %vm261 = vcmp.ne.s32.totalorder %v238, 0
    %vm262 = vcmp.ne.s32.totalorder %v239, 0
    %vm263 = vcmp.ne.s32.totalorder %v241, 0
    %vm264 = vcmp.ne.s32.totalorder %v243, 0
    %vm265 = vcmp.ne.s32.totalorder %v245, 0
    %vm266 = vcmp.ne.s32.totalorder %v247, 0
    %vm267 = vcmp.ne.s32.totalorder %v249, 0
    %vm268 = vcmp.ne.s32.totalorder %v251, 0
    %vm269 = vcmp.ne.s32.totalorder %v253, 0
    %v270 = vsel %vm254, 1, 0
    %v271 = vsel %vm255, 1, 0
    %v272 = vsel %vm256, 1, 0
    %v273 = vsel %vm257, 1, 0
    %v274 = vsel %vm258, 1, 0
    %v275 = vsel %vm259, 1, 0
    %v276 = vsel %vm260, 1, 0
    %v277 = vsel %vm261, 1, 0
    %v278 = vsel %vm262, 1, 0
    %v279 = vsel %vm263, 1, 0
    %v280 = vsel %vm264, 1, 0
    %v281 = vsel %vm265, 1, 0
    %v282 = vsel %vm266, 1, 0
    %v283 = vsel %vm267, 1, 0
    %v284 = vsel %vm268, 1, 0
    %v285 = vsel %vm269, 1, 0
    %v286 = vcvt.s32.f32 %v270
    %v287 = vcvt.s32.f32 %v271
    %v288 = vcvt.s32.f32 %v272
    %v289 = vcvt.s32.f32 %v273
    %v290 = vcvt.s32.f32 %v274
    %v291 = vcvt.s32.f32 %v275
    %v292 = vcvt.s32.f32 %v276
    %v293 = vcvt.s32.f32 %v277
    %v294 = vcvt.s32.f32 %v278
    %v295 = vcvt.s32.f32 %v279
    %v296 = vcvt.s32.f32 %v280
    %v297 = vcvt.s32.f32 %v281
    %v298 = vcvt.s32.f32 %v282
    %v299 = vcvt.s32.f32 %v283
    %v300 = vcvt.s32.f32 %v284
    %v301 = vcvt.s32.f32 %v285
    %v318 = vperm.slane %v286, 0
    %v319 = vperm.slane %v286, 1
    %v320 = vperm.slane %v287, 0
    %v321 = vperm.slane %v287, 1
    %v322 = vperm.slane %v288, 0
    %v323 = vperm.slane %v288, 1
    %v324 = vperm.slane %v289, 0
    %v325 = vperm.slane %v289, 1
    %v326 = vperm.slane %v290, 0
    %v327 = vperm.slane %v290, 1
    %v328 = vperm.slane %v291, 0
    %v329 = vperm.slane %v291, 1
    %v330 = vperm.slane %v292, 0
    %v331 = vperm.slane %v292, 1
    %v332 = vperm.slane %v293, 0
    %v333 = vperm.slane %v293, 1
    %v334 = vperm.slane %v294, 0
    %v335 = vperm.slane %v294, 1
    %v336 = vperm.slane %v295, 0
    %v337 = vperm.slane %v295, 1
    %v338 = vperm.slane %v296, 0
    %v339 = vperm.slane %v296, 1
    %v340 = vperm.slane %v297, 0
    %v341 = vperm.slane %v297, 1
    %v342 = vperm.slane %v298, 0
    %v343 = vperm.slane %v298, 1
    %v344 = vperm.slane %v299, 0
    %v345 = vperm.slane %v299, 1
    %v346 = vperm.slane %v300, 0
    %v347 = vperm.slane %v300, 1
    %v348 = vperm.slane %v301, 0
    %v349 = vperm.slane %v301, 1
    %v382 = vsel %vm209, %v318, 0.0
    %v383 = vsel %vm209, %v319, 0.0
    %v384 = vsel %vm209, %v320, 0.0
    %v385 = vsel %vm209, %v321, 0.0
    %v386 = vsel %vm209, %v322, 0.0
    %v387 = vsel %vm209, %v323, 0.0
    %v388 = vsel %vm209, %v324, 0.0
    %v389 = vsel %vm209, %v325, 0.0
    %v390 = vsel %vm209, %v326, 0.0
    %v391 = vsel %vm209, %v327, 0.0
    %v392 = vsel %vm209, %v328, 0.0
    %v393 = vsel %vm209, %v329, 0.0
    %v394 = vsel %vm209, %v330, 0.0
    %v395 = vsel %vm209, %v331, 0.0
    %v396 = vsel %vm209, %v332, 0.0
    %v397 = vsel %vm209, %v333, 0.0
    %v398 = vsel %vm209, %v334, 0.0
    %v399 = vsel %vm209, %v335, 0.0
    %v400 = vsel %vm209, %v336, 0.0
    %v401 = vsel %vm209, %v337, 0.0
    %v402 = vsel %vm209, %v338, 0.0
    %v403 = vsel %vm209, %v339, 0.0
    %v404 = vsel %vm209, %v340, 0.0
    %v405 = vsel %vm209, %v341, 0.0
    %v406 = vsel %vm209, %v342, 0.0
    %v407 = vsel %vm209, %v343, 0.0
    %v408 = vsel %vm209, %v344, 0.0
    %v409 = vsel %vm209, %v345, 0.0
    %v410 = vsel %vm209, %v346, 0.0
    %v411 = vsel %vm209, %v347, 0.0
    %v412 = vsel %vm209, %v348, 0.0
    %v413 = vsel %vm209, %v349, 0.0
    %v414 = vsel %vm205, -inf, %v169
    %v415 = vsel %vm206, -inf, %v192
    %v416 = vsel %vm207, -inf, %v172
    %v417 = vsel %vm208, -inf, %v195
    %v418 = vmax.f32 %v414, %v415
    %419 = vmax.xlane.f32.xlu0 %v418
    %v420 = vpop.xlane.xlu0 %419
    %v421 = vmax.f32 %v416, %v417
    %422 = vmax.xlane.f32.xlu0 %v421
    %v423 = vpop.xlane.xlu0 %422
    %vm424 = vcmp.eq.f32.partialorder %v414, %v420
    %vm425 = vcmp.eq.f32.partialorder %v415, %v420
    %vm426 = vcmp.eq.f32.partialorder %v416, %v423
    %vm427 = vcmp.eq.f32.partialorder %v417, %v423
    %vm428 = vcmp.eq.s32.totalorder %v198, 1
    %v429 = vsel %vm424, 1, 0
    %v430 = vsel %vm425, 1, 0
    %v431 = vsel %vm426, 1, 0
    %v432 = vsel %vm427, 1, 0
    %v433 = vrot.slane %v430, 7
    %v434 = vrot.slane %v432, 7
    %v435 = vsel %vm216, %v429, %v433
    %v436 = vsel %vm218, %v429, %v433
    %v437 = vrot.slane %v436, 1
    %v438 = vsel %vm221, %v429, %v433
    %v439 = vrot.slane %v438, 2
    %v440 = vsel %vm224, %v429, %v433
    %v441 = vrot.slane %v440, 3
    %v442 = vsel %vm227, %v429, %v433
    %v443 = vrot.slane %v442, 4
    %v444 = vsel %vm230, %v429, %v433
    %v445 = vrot.slane %v444, 5
    %v446 = vsel %vm233, %v429, %v433
    %v447 = vrot.slane %v446, 6
    %v448 = vsel %vm236, %v433, %v429
    %v449 = vrot.slane %v448, 7
    %v450 = vsel %vm216, %v431, %v434
    %v451 = vsel %vm218, %v431, %v434
    %v452 = vrot.slane %v451, 1
    %v453 = vsel %vm221, %v431, %v434
    %v454 = vrot.slane %v453, 2
    %v455 = vsel %vm224, %v431, %v434
    %v456 = vrot.slane %v455, 3
    %v457 = vsel %vm227, %v431, %v434
    %v458 = vrot.slane %v457, 4
    %v459 = vsel %vm230, %v431, %v434
    %v460 = vrot.slane %v459, 5
    %v461 = vsel %vm233, %v431, %v434
    %v462 = vrot.slane %v461, 6
    %v463 = vsel %vm236, %v434, %v431
    %v464 = vrot.slane %v463, 7
    %vm465 = vcmp.ne.s32.totalorder %v435, 0
    %vm466 = vcmp.ne.s32.totalorder %v437, 0
    %vm467 = vcmp.ne.s32.totalorder %v439, 0
    %vm468 = vcmp.ne.s32.totalorder %v441, 0
    %vm469 = vcmp.ne.s32.totalorder %v443, 0
    %vm470 = vcmp.ne.s32.totalorder %v445, 0
    %vm471 = vcmp.ne.s32.totalorder %v447, 0
    %vm472 = vcmp.ne.s32.totalorder %v449, 0
    %vm473 = vcmp.ne.s32.totalorder %v450, 0
    %vm474 = vcmp.ne.s32.totalorder %v452, 0
    %vm475 = vcmp.ne.s32.totalorder %v454, 0
    %vm476 = vcmp.ne.s32.totalorder %v456, 0
    %vm477 = vcmp.ne.s32.totalorder %v458, 0
    %vm478 = vcmp.ne.s32.totalorder %v460, 0
    %vm479 = vcmp.ne.s32.totalorder %v462, 0
    %vm480 = vcmp.ne.s32.totalorder %v464, 0
    %v481 = vsel %vm465, 1, 0
    %v482 = vsel %vm466, 1, 0
    %v483 = vsel %vm467, 1, 0
    %v484 = vsel %vm468, 1, 0
    %v485 = vsel %vm469, 1, 0
    %v486 = vsel %vm470, 1, 0
    %v487 = vsel %vm471, 1, 0
    %v488 = vsel %vm472, 1, 0
    %v489 = vsel %vm473, 1, 0
    %v490 = vsel %vm474, 1, 0
    %v491 = vsel %vm475, 1, 0
    %v492 = vsel %vm476, 1, 0
    %v493 = vsel %vm477, 1, 0
    %v494 = vsel %vm478, 1, 0
    %v495 = vsel %vm479, 1, 0
    %v496 = vsel %vm480, 1, 0
    %v497 = vcvt.s32.f32 %v481
    %v498 = vcvt.s32.f32 %v482
    %v499 = vcvt.s32.f32 %v483
    %v500 = vcvt.s32.f32 %v484
    %v501 = vcvt.s32.f32 %v485
    %v502 = vcvt.s32.f32 %v486
    %v503 = vcvt.s32.f32 %v487
    %v504 = vcvt.s32.f32 %v488
    %v505 = vcvt.s32.f32 %v489
    %v506 = vcvt.s32.f32 %v490
    %v507 = vcvt.s32.f32 %v491
    %v508 = vcvt.s32.f32 %v492
    %v509 = vcvt.s32.f32 %v493
    %v510 = vcvt.s32.f32 %v494
    %v511 = vcvt.s32.f32 %v495
    %v512 = vcvt.s32.f32 %v496
    %v529 = vperm.slane %v497, 0
    %v530 = vperm.slane %v497, 1
    %v531 = vperm.slane %v498, 0
    %v532 = vperm.slane %v498, 1
    %v533 = vperm.slane %v499, 0
    %v534 = vperm.slane %v499, 1
    %v535 = vperm.slane %v500, 0
    %v536 = vperm.slane %v500, 1
    %v537 = vperm.slane %v501, 0
    %v538 = vperm.slane %v501, 1
    %v539 = vperm.slane %v502, 0
    %v540 = vperm.slane %v502, 1
    %v541 = vperm.slane %v503, 0
    %v542 = vperm.slane %v503, 1
    %v543 = vperm.slane %v504, 0
    %v544 = vperm.slane %v504, 1
    %v545 = vperm.slane %v505, 0
    %v546 = vperm.slane %v505, 1
    %v547 = vperm.slane %v506, 0
    %v548 = vperm.slane %v506, 1
    %v549 = vperm.slane %v507, 0
    %v550 = vperm.slane %v507, 1
    %v551 = vperm.slane %v508, 0
    %v552 = vperm.slane %v508, 1
    %v553 = vperm.slane %v509, 0
    %v554 = vperm.slane %v509, 1
    %v555 = vperm.slane %v510, 0
    %v556 = vperm.slane %v510, 1
    %v557 = vperm.slane %v511, 0
    %v558 = vperm.slane %v511, 1
    %v559 = vperm.slane %v512, 0
    %v560 = vperm.slane %v512, 1
    %v593 = vsel %vm428, %v529, %v382
    %v594 = vsel %vm428, %v530, %v383
    %v595 = vsel %vm428, %v531, %v384
    %v596 = vsel %vm428, %v532, %v385
    %v597 = vsel %vm428, %v533, %v386
    %v598 = vsel %vm428, %v534, %v387
    %v599 = vsel %vm428, %v535, %v388
    %v600 = vsel %vm428, %v536, %v389
    %v601 = vsel %vm428, %v537, %v390
    %v602 = vsel %vm428, %v538, %v391
    %v603 = vsel %vm428, %v539, %v392
    %v604 = vsel %vm428, %v540, %v393
    %v605 = vsel %vm428, %v541, %v394
    %v606 = vsel %vm428, %v542, %v395
    %v607 = vsel %vm428, %v543, %v396
    %v608 = vsel %vm428, %v544, %v397
    %v609 = vsel %vm428, %v545, %v398
    %v610 = vsel %vm428, %v546, %v399
    %v611 = vsel %vm428, %v547, %v400
    %v612 = vsel %vm428, %v548, %v401
    %v613 = vsel %vm428, %v549, %v402
    %v614 = vsel %vm428, %v550, %v403
    %v615 = vsel %vm428, %v551, %v404
    %v616 = vsel %vm428, %v552, %v405
    %v617 = vsel %vm428, %v553, %v406
    %v618 = vsel %vm428, %v554, %v407
    %v619 = vsel %vm428, %v555, %v408
    %v620 = vsel %vm428, %v556, %v409
    %v621 = vsel %vm428, %v557, %v410
    %v622 = vsel %vm428, %v558, %v411
    %v623 = vsel %vm428, %v559, %v412
    %v624 = vsel %vm428, %v560, %v413
    %v625 = vsel %vm424, -inf, %v414
    %v626 = vsel %vm425, -inf, %v415
    %v627 = vsel %vm426, -inf, %v416
    %v628 = vsel %vm427, -inf, %v417
    %v629 = vmax.f32 %v625, %v626
    %630 = vmax.xlane.f32.xlu0 %v629
    %v631 = vpop.xlane.xlu0 %630
    %v632 = vmax.f32 %v627, %v628
    %633 = vmax.xlane.f32.xlu0 %v632
    %v634 = vpop.xlane.xlu0 %633
    %vm635 = vcmp.eq.f32.partialorder %v625, %v631
    %vm636 = vcmp.eq.f32.partialorder %v626, %v631
    %vm637 = vcmp.eq.f32.partialorder %v627, %v634
    %vm638 = vcmp.eq.f32.partialorder %v628, %v634
    %vm639 = vcmp.eq.s32.totalorder %v198, 2
    %v640 = vsel %vm635, 1, 0
    %v641 = vsel %vm636, 1, 0
    %v642 = vsel %vm637, 1, 0
    %v643 = vsel %vm638, 1, 0
    %v644 = vrot.slane %v641, 7
    %v645 = vrot.slane %v643, 7
    %v646 = vsel %vm216, %v640, %v644
    %v647 = vsel %vm218, %v640, %v644
    %v648 = vrot.slane %v647, 1
    %v649 = vsel %vm221, %v640, %v644
    %v650 = vrot.slane %v649, 2
    %v651 = vsel %vm224, %v640, %v644
    %v652 = vrot.slane %v651, 3
    %v653 = vsel %vm227, %v640, %v644
    %v654 = vrot.slane %v653, 4
    %v655 = vsel %vm230, %v640, %v644
    %v656 = vrot.slane %v655, 5
    %v657 = vsel %vm233, %v640, %v644
    %v658 = vrot.slane %v657, 6
    %v659 = vsel %vm236, %v644, %v640
    %v660 = vrot.slane %v659, 7
    %v661 = vsel %vm216, %v642, %v645
    %v662 = vsel %vm218, %v642, %v645
    %v663 = vrot.slane %v662, 1
    %v664 = vsel %vm221, %v642, %v645
    %v665 = vrot.slane %v664, 2
    %v666 = vsel %vm224, %v642, %v645
    %v667 = vrot.slane %v666, 3
    %v668 = vsel %vm227, %v642, %v645
    %v669 = vrot.slane %v668, 4
    %v670 = vsel %vm230, %v642, %v645
    %v671 = vrot.slane %v670, 5
    %v672 = vsel %vm233, %v642, %v645
    %v673 = vrot.slane %v672, 6
    %v674 = vsel %vm236, %v645, %v642
    %v675 = vrot.slane %v674, 7
    %vm676 = vcmp.ne.s32.totalorder %v646, 0
    %vm677 = vcmp.ne.s32.totalorder %v648, 0
    %vm678 = vcmp.ne.s32.totalorder %v650, 0
    %vm679 = vcmp.ne.s32.totalorder %v652, 0
    %vm680 = vcmp.ne.s32.totalorder %v654, 0
    %vm681 = vcmp.ne.s32.totalorder %v656, 0
    %vm682 = vcmp.ne.s32.totalorder %v658, 0
    %vm683 = vcmp.ne.s32.totalorder %v660, 0
    %vm684 = vcmp.ne.s32.totalorder %v661, 0
    %vm685 = vcmp.ne.s32.totalorder %v663, 0
    %vm686 = vcmp.ne.s32.totalorder %v665, 0
    %vm687 = vcmp.ne.s32.totalorder %v667, 0
    %vm688 = vcmp.ne.s32.totalorder %v669, 0
    %vm689 = vcmp.ne.s32.totalorder %v671, 0
    %vm690 = vcmp.ne.s32.totalorder %v673, 0
    %vm691 = vcmp.ne.s32.totalorder %v675, 0
    %v692 = vsel %vm676, 1, 0
    %v693 = vsel %vm677, 1, 0
    %v694 = vsel %vm678, 1, 0
    %v695 = vsel %vm679, 1, 0
    %v696 = vsel %vm680, 1, 0
    %v697 = vsel %vm681, 1, 0
    %v698 = vsel %vm682, 1, 0
    %v699 = vsel %vm683, 1, 0
    %v700 = vsel %vm684, 1, 0
    %v701 = vsel %vm685, 1, 0
    %v702 = vsel %vm686, 1, 0
    %v703 = vsel %vm687, 1, 0
    %v704 = vsel %vm688, 1, 0
    %v705 = vsel %vm689, 1, 0
    %v706 = vsel %vm690, 1, 0
    %v707 = vsel %vm691, 1, 0
    %v708 = vcvt.s32.f32 %v692
    %v709 = vcvt.s32.f32 %v693
    %v710 = vcvt.s32.f32 %v694
    %v711 = vcvt.s32.f32 %v695
    %v712 = vcvt.s32.f32 %v696
    %v713 = vcvt.s32.f32 %v697
    %v714 = vcvt.s32.f32 %v698
    %v715 = vcvt.s32.f32 %v699
    %v716 = vcvt.s32.f32 %v700
    %v717 = vcvt.s32.f32 %v701
    %v718 = vcvt.s32.f32 %v702
    %v719 = vcvt.s32.f32 %v703
    %v720 = vcvt.s32.f32 %v704
    %v721 = vcvt.s32.f32 %v705
    %v722 = vcvt.s32.f32 %v706
    %v723 = vcvt.s32.f32 %v707
    %v740 = vperm.slane %v708, 0
    %v741 = vperm.slane %v708, 1
    %v742 = vperm.slane %v709, 0
    %v743 = vperm.slane %v709, 1
    %v744 = vperm.slane %v710, 0
    %v745 = vperm.slane %v710, 1
    %v746 = vperm.slane %v711, 0
    %v747 = vperm.slane %v711, 1
    %v748 = vperm.slane %v712, 0
    %v749 = vperm.slane %v712, 1
    %v750 = vperm.slane %v713, 0
    %v751 = vperm.slane %v713, 1
    %v752 = vperm.slane %v714, 0
    %v753 = vperm.slane %v714, 1
    %v754 = vperm.slane %v715, 0
    %v755 = vperm.slane %v715, 1
    %v756 = vperm.slane %v716, 0
    %v757 = vperm.slane %v716, 1
    %v758 = vperm.slane %v717, 0
    %v759 = vperm.slane %v717, 1
    %v760 = vperm.slane %v718, 0
    %v761 = vperm.slane %v718, 1
    %v762 = vperm.slane %v719, 0
    %v763 = vperm.slane %v719, 1
    %v764 = vperm.slane %v720, 0
    %v765 = vperm.slane %v720, 1
    %v766 = vperm.slane %v721, 0
    %v767 = vperm.slane %v721, 1
    %v768 = vperm.slane %v722, 0
    %v769 = vperm.slane %v722, 1
    %v770 = vperm.slane %v723, 0
    %v771 = vperm.slane %v723, 1
    %v804 = vsel %vm639, %v740, %v593
    %v805 = vsel %vm639, %v741, %v594
    %v806 = vsel %vm639, %v742, %v595
    %v807 = vsel %vm639, %v743, %v596
    %v808 = vsel %vm639, %v744, %v597
    %v809 = vsel %vm639, %v745, %v598
    %v810 = vsel %vm639, %v746, %v599
    %v811 = vsel %vm639, %v747, %v600
    %v812 = vsel %vm639, %v748, %v601
    %v813 = vsel %vm639, %v749, %v602
    %v814 = vsel %vm639, %v750, %v603
    %v815 = vsel %vm639, %v751, %v604
    %v816 = vsel %vm639, %v752, %v605
    %v817 = vsel %vm639, %v753, %v606
    %v818 = vsel %vm639, %v754, %v607
    %v819 = vsel %vm639, %v755, %v608
    %v820 = vsel %vm639, %v756, %v609
    %v821 = vsel %vm639, %v757, %v610
    %v822 = vsel %vm639, %v758, %v611
    %v823 = vsel %vm639, %v759, %v612
    %v824 = vsel %vm639, %v760, %v613
    %v825 = vsel %vm639, %v761, %v614
    %v826 = vsel %vm639, %v762, %v615
    %v827 = vsel %vm639, %v763, %v616
    %v828 = vsel %vm639, %v764, %v617
    %v829 = vsel %vm639, %v765, %v618
    %v830 = vsel %vm639, %v766, %v619
    %v831 = vsel %vm639, %v767, %v620
    %v832 = vsel %vm639, %v768, %v621
    %v833 = vsel %vm639, %v769, %v622
    %v834 = vsel %vm639, %v770, %v623
    %v835 = vsel %vm639, %v771, %v624
    %v836 = vsel %vm635, -inf, %v625
    %v837 = vsel %vm636, -inf, %v626
    %v838 = vsel %vm637, -inf, %v627
    %v839 = vsel %vm638, -inf, %v628
    %v840 = vmax.f32 %v836, %v837
    %841 = vmax.xlane.f32.xlu0 %v840
    %v842 = vpop.xlane.xlu0 %841
    %v843 = vmax.f32 %v838, %v839
    %844 = vmax.xlane.f32.xlu0 %v843
    %v845 = vpop.xlane.xlu0 %844
    %vm846 = vcmp.eq.f32.partialorder %v836, %v842
    %vm847 = vcmp.eq.f32.partialorder %v837, %v842
    %vm848 = vcmp.eq.f32.partialorder %v838, %v845
    %vm849 = vcmp.eq.f32.partialorder %v839, %v845
    %vm850 = vcmp.eq.s32.totalorder %v198, 3
    %v851 = vsel %vm846, 1, 0
    %v852 = vsel %vm847, 1, 0
    %v853 = vsel %vm848, 1, 0
    %v854 = vsel %vm849, 1, 0
    %v855 = vrot.slane %v852, 7
    %v856 = vrot.slane %v854, 7
    %v857 = vsel %vm216, %v851, %v855
    %v858 = vsel %vm218, %v851, %v855
    %v859 = vrot.slane %v858, 1
    %v860 = vsel %vm221, %v851, %v855
    %v861 = vrot.slane %v860, 2
    %v862 = vsel %vm224, %v851, %v855
    %v863 = vrot.slane %v862, 3
    %v864 = vsel %vm227, %v851, %v855
    %v865 = vrot.slane %v864, 4
    %v866 = vsel %vm230, %v851, %v855
    %v867 = vrot.slane %v866, 5
    %v868 = vsel %vm233, %v851, %v855
    %v869 = vrot.slane %v868, 6
    %v870 = vsel %vm236, %v855, %v851
    %v871 = vrot.slane %v870, 7
    %v872 = vsel %vm216, %v853, %v856
    %v873 = vsel %vm218, %v853, %v856
    %v874 = vrot.slane %v873, 1
    %v875 = vsel %vm221, %v853, %v856
    %v876 = vrot.slane %v875, 2
    %v877 = vsel %vm224, %v853, %v856
    %v878 = vrot.slane %v877, 3
    %v879 = vsel %vm227, %v853, %v856
    %v880 = vrot.slane %v879, 4
    %v881 = vsel %vm230, %v853, %v856
    %v882 = vrot.slane %v881, 5
    %v883 = vsel %vm233, %v853, %v856
    %v884 = vrot.slane %v883, 6
    %v885 = vsel %vm236, %v856, %v853
    %v886 = vrot.slane %v885, 7
    %vm887 = vcmp.ne.s32.totalorder %v857, 0
    %vm888 = vcmp.ne.s32.totalorder %v859, 0
    %vm889 = vcmp.ne.s32.totalorder %v861, 0
    %vm890 = vcmp.ne.s32.totalorder %v863, 0
    %vm891 = vcmp.ne.s32.totalorder %v865, 0
    %vm892 = vcmp.ne.s32.totalorder %v867, 0
    %vm893 = vcmp.ne.s32.totalorder %v869, 0
    %vm894 = vcmp.ne.s32.totalorder %v871, 0
    %vm895 = vcmp.ne.s32.totalorder %v872, 0
    %vm896 = vcmp.ne.s32.totalorder %v874, 0
    %vm897 = vcmp.ne.s32.totalorder %v876, 0
    %vm898 = vcmp.ne.s32.totalorder %v878, 0
    %vm899 = vcmp.ne.s32.totalorder %v880, 0
    %vm900 = vcmp.ne.s32.totalorder %v882, 0
    %vm901 = vcmp.ne.s32.totalorder %v884, 0
    %vm902 = vcmp.ne.s32.totalorder %v886, 0
    %v903 = vsel %vm887, 1, 0
    %v904 = vsel %vm888, 1, 0
    %v905 = vsel %vm889, 1, 0
    %v906 = vsel %vm890, 1, 0
    %v907 = vsel %vm891, 1, 0
    %v908 = vsel %vm892, 1, 0
    %v909 = vsel %vm893, 1, 0
    %v910 = vsel %vm894, 1, 0
    %v911 = vsel %vm895, 1, 0
    %v912 = vsel %vm896, 1, 0
    %v913 = vsel %vm897, 1, 0
    %v914 = vsel %vm898, 1, 0
    %v915 = vsel %vm899, 1, 0
    %v916 = vsel %vm900, 1, 0
    %v917 = vsel %vm901, 1, 0
    %v918 = vsel %vm902, 1, 0
    %v919 = vcvt.s32.f32 %v903
    %v920 = vcvt.s32.f32 %v904
    %v921 = vcvt.s32.f32 %v905
    %v922 = vcvt.s32.f32 %v906
    %v923 = vcvt.s32.f32 %v907
    %v924 = vcvt.s32.f32 %v908
    %v925 = vcvt.s32.f32 %v909
    %v926 = vcvt.s32.f32 %v910
    %v927 = vcvt.s32.f32 %v911
    %v928 = vcvt.s32.f32 %v912
    %v929 = vcvt.s32.f32 %v913
    %v930 = vcvt.s32.f32 %v914
    %v931 = vcvt.s32.f32 %v915
    %v932 = vcvt.s32.f32 %v916
    %v933 = vcvt.s32.f32 %v917
    %v934 = vcvt.s32.f32 %v918
    %v951 = vperm.slane %v919, 0
    %v952 = vperm.slane %v919, 1
    %v953 = vperm.slane %v920, 0
    %v954 = vperm.slane %v920, 1
    %v955 = vperm.slane %v921, 0
    %v956 = vperm.slane %v921, 1
    %v957 = vperm.slane %v922, 0
    %v958 = vperm.slane %v922, 1
    %v959 = vperm.slane %v923, 0
    %v960 = vperm.slane %v923, 1
    %v961 = vperm.slane %v924, 0
    %v962 = vperm.slane %v924, 1
    %v963 = vperm.slane %v925, 0
    %v964 = vperm.slane %v925, 1
    %v965 = vperm.slane %v926, 0
    %v966 = vperm.slane %v926, 1
    %v967 = vperm.slane %v927, 0
    %v968 = vperm.slane %v927, 1
    %v969 = vperm.slane %v928, 0
    %v970 = vperm.slane %v928, 1
    %v971 = vperm.slane %v929, 0
    %v972 = vperm.slane %v929, 1
    %v973 = vperm.slane %v930, 0
    %v974 = vperm.slane %v930, 1
    %v975 = vperm.slane %v931, 0
    %v976 = vperm.slane %v931, 1
    %v977 = vperm.slane %v932, 0
    %v978 = vperm.slane %v932, 1
    %v979 = vperm.slane %v933, 0
    %v980 = vperm.slane %v933, 1
    %v981 = vperm.slane %v934, 0
    %v982 = vperm.slane %v934, 1
    %v1015 = vsel %vm850, %v951, %v804
    %v1016 = vsel %vm850, %v952, %v805
    %v1017 = vsel %vm850, %v953, %v806
    %v1018 = vsel %vm850, %v954, %v807
    %v1019 = vsel %vm850, %v955, %v808
    %v1020 = vsel %vm850, %v956, %v809
    %v1021 = vsel %vm850, %v957, %v810
    %v1022 = vsel %vm850, %v958, %v811
    %v1023 = vsel %vm850, %v959, %v812
    %v1024 = vsel %vm850, %v960, %v813
    %v1025 = vsel %vm850, %v961, %v814
    %v1026 = vsel %vm850, %v962, %v815
    %v1027 = vsel %vm850, %v963, %v816
    %v1028 = vsel %vm850, %v964, %v817
    %v1029 = vsel %vm850, %v965, %v818
    %v1030 = vsel %vm850, %v966, %v819
    %v1031 = vsel %vm850, %v967, %v820
    %v1032 = vsel %vm850, %v968, %v821
    %v1033 = vsel %vm850, %v969, %v822
    %v1034 = vsel %vm850, %v970, %v823
    %v1035 = vsel %vm850, %v971, %v824
    %v1036 = vsel %vm850, %v972, %v825
    %v1037 = vsel %vm850, %v973, %v826
    %v1038 = vsel %vm850, %v974, %v827
    %v1039 = vsel %vm850, %v975, %v828
    %v1040 = vsel %vm850, %v976, %v829
    %v1041 = vsel %vm850, %v977, %v830
    %v1042 = vsel %vm850, %v978, %v831
    %v1043 = vsel %vm850, %v979, %v832
    %v1044 = vsel %vm850, %v980, %v833
    %v1045 = vsel %vm850, %v981, %v834
    %v1046 = vsel %vm850, %v982, %v835
    %v1047 = vsel %vm846, -inf, %v836
    %v1048 = vsel %vm847, -inf, %v837
    %v1049 = vsel %vm848, -inf, %v838
    %v1050 = vsel %vm849, -inf, %v839
    %v1051 = vmax.f32 %v1047, %v1048
    %1052 = vmax.xlane.f32.xlu0 %v1051
    %v1053 = vpop.xlane.xlu0 %1052
    %v1054 = vmax.f32 %v1049, %v1050
    %1055 = vmax.xlane.f32.xlu0 %v1054
    %v1056 = vpop.xlane.xlu0 %1055
    %vm1057 = vcmp.eq.f32.partialorder %v1047, %v1053
    %vm1058 = vcmp.eq.f32.partialorder %v1048, %v1053
    %vm1059 = vcmp.eq.f32.partialorder %v1049, %v1056
    %vm1060 = vcmp.eq.f32.partialorder %v1050, %v1056
    %vm1061 = vcmp.eq.s32.totalorder %v198, 4
    %v1062 = vsel %vm1057, 1, 0
    %v1063 = vsel %vm1058, 1, 0
    %v1064 = vsel %vm1059, 1, 0
    %v1065 = vsel %vm1060, 1, 0
    %v1066 = vrot.slane %v1063, 7
    %v1067 = vrot.slane %v1065, 7
    %v1068 = vsel %vm216, %v1062, %v1066
    %v1069 = vsel %vm218, %v1062, %v1066
    %v1070 = vrot.slane %v1069, 1
    %v1071 = vsel %vm221, %v1062, %v1066
    %v1072 = vrot.slane %v1071, 2
    %v1073 = vsel %vm224, %v1062, %v1066
    %v1074 = vrot.slane %v1073, 3
    %v1075 = vsel %vm227, %v1062, %v1066
    %v1076 = vrot.slane %v1075, 4
    %v1077 = vsel %vm230, %v1062, %v1066
    %v1078 = vrot.slane %v1077, 5
    %v1079 = vsel %vm233, %v1062, %v1066
    %v1080 = vrot.slane %v1079, 6
    %v1081 = vsel %vm236, %v1066, %v1062
    %v1082 = vrot.slane %v1081, 7
    %v1083 = vsel %vm216, %v1064, %v1067
    %v1084 = vsel %vm218, %v1064, %v1067
    %v1085 = vrot.slane %v1084, 1
    %v1086 = vsel %vm221, %v1064, %v1067
    %v1087 = vrot.slane %v1086, 2
    %v1088 = vsel %vm224, %v1064, %v1067
    %v1089 = vrot.slane %v1088, 3
    %v1090 = vsel %vm227, %v1064, %v1067
    %v1091 = vrot.slane %v1090, 4
    %v1092 = vsel %vm230, %v1064, %v1067
    %v1093 = vrot.slane %v1092, 5
    %v1094 = vsel %vm233, %v1064, %v1067
    %v1095 = vrot.slane %v1094, 6
    %v1096 = vsel %vm236, %v1067, %v1064
    %v1097 = vrot.slane %v1096, 7
    %vm1098 = vcmp.ne.s32.totalorder %v1068, 0
    %vm1099 = vcmp.ne.s32.totalorder %v1070, 0
    %vm1100 = vcmp.ne.s32.totalorder %v1072, 0
    %vm1101 = vcmp.ne.s32.totalorder %v1074, 0
    %vm1102 = vcmp.ne.s32.totalorder %v1076, 0
    %vm1103 = vcmp.ne.s32.totalorder %v1078, 0
    %vm1104 = vcmp.ne.s32.totalorder %v1080, 0
    %vm1105 = vcmp.ne.s32.totalorder %v1082, 0
    %vm1106 = vcmp.ne.s32.totalorder %v1083, 0
    %vm1107 = vcmp.ne.s32.totalorder %v1085, 0
    %vm1108 = vcmp.ne.s32.totalorder %v1087, 0
    %vm1109 = vcmp.ne.s32.totalorder %v1089, 0
    %vm1110 = vcmp.ne.s32.totalorder %v1091, 0
    %vm1111 = vcmp.ne.s32.totalorder %v1093, 0
    %vm1112 = vcmp.ne.s32.totalorder %v1095, 0
    %vm1113 = vcmp.ne.s32.totalorder %v1097, 0
    %v1114 = vsel %vm1098, 1, 0
    %v1115 = vsel %vm1099, 1, 0
    %v1116 = vsel %vm1100, 1, 0
    %v1117 = vsel %vm1101, 1, 0
    %v1118 = vsel %vm1102, 1, 0
    %v1119 = vsel %vm1103, 1, 0
    %v1120 = vsel %vm1104, 1, 0
    %v1121 = vsel %vm1105, 1, 0
    %v1122 = vsel %vm1106, 1, 0
    %v1123 = vsel %vm1107, 1, 0
    %v1124 = vsel %vm1108, 1, 0
    %v1125 = vsel %vm1109, 1, 0
    %v1126 = vsel %vm1110, 1, 0
    %v1127 = vsel %vm1111, 1, 0
    %v1128 = vsel %vm1112, 1, 0
    %v1129 = vsel %vm1113, 1, 0
    %v1130 = vcvt.s32.f32 %v1114
    %v1131 = vcvt.s32.f32 %v1115
    %v1132 = vcvt.s32.f32 %v1116
    %v1133 = vcvt.s32.f32 %v1117
    %v1134 = vcvt.s32.f32 %v1118
    %v1135 = vcvt.s32.f32 %v1119
    %v1136 = vcvt.s32.f32 %v1120
    %v1137 = vcvt.s32.f32 %v1121
    %v1138 = vcvt.s32.f32 %v1122
    %v1139 = vcvt.s32.f32 %v1123
    %v1140 = vcvt.s32.f32 %v1124
    %v1141 = vcvt.s32.f32 %v1125
    %v1142 = vcvt.s32.f32 %v1126
    %v1143 = vcvt.s32.f32 %v1127
    %v1144 = vcvt.s32.f32 %v1128
    %v1145 = vcvt.s32.f32 %v1129
    %v1162 = vperm.slane %v1130, 0
    %v1163 = vperm.slane %v1130, 1
    %v1164 = vperm.slane %v1131, 0
    %v1165 = vperm.slane %v1131, 1
    %v1166 = vperm.slane %v1132, 0
    %v1167 = vperm.slane %v1132, 1
    %v1168 = vperm.slane %v1133, 0
    %v1169 = vperm.slane %v1133, 1
    %v1170 = vperm.slane %v1134, 0
    %v1171 = vperm.slane %v1134, 1
    %v1172 = vperm.slane %v1135, 0
    %v1173 = vperm.slane %v1135, 1
    %v1174 = vperm.slane %v1136, 0
    %v1175 = vperm.slane %v1136, 1
    %v1176 = vperm.slane %v1137, 0
    %v1177 = vperm.slane %v1137, 1
    %v1178 = vperm.slane %v1138, 0
    %v1179 = vperm.slane %v1138, 1
    %v1180 = vperm.slane %v1139, 0
    %v1181 = vperm.slane %v1139, 1
    %v1182 = vperm.slane %v1140, 0
    %v1183 = vperm.slane %v1140, 1
    %v1184 = vperm.slane %v1141, 0
    %v1185 = vperm.slane %v1141, 1
    %v1186 = vperm.slane %v1142, 0
    %v1187 = vperm.slane %v1142, 1
    %v1188 = vperm.slane %v1143, 0
    %v1189 = vperm.slane %v1143, 1
    %v1190 = vperm.slane %v1144, 0
    %v1191 = vperm.slane %v1144, 1
    %v1192 = vperm.slane %v1145, 0
    %v1193 = vperm.slane %v1145, 1
    %v1226 = vsel %vm1061, %v1162, %v1015
    %v1227 = vsel %vm1061, %v1163, %v1016
    %v1228 = vsel %vm1061, %v1164, %v1017
    %v1229 = vsel %vm1061, %v1165, %v1018
    %v1230 = vsel %vm1061, %v1166, %v1019
    %v1231 = vsel %vm1061, %v1167, %v1020
    %v1232 = vsel %vm1061, %v1168, %v1021
    %v1233 = vsel %vm1061, %v1169, %v1022
    %v1234 = vsel %vm1061, %v1170, %v1023
    %v1235 = vsel %vm1061, %v1171, %v1024
    %v1236 = vsel %vm1061, %v1172, %v1025
    %v1237 = vsel %vm1061, %v1173, %v1026
    %v1238 = vsel %vm1061, %v1174, %v1027
    %v1239 = vsel %vm1061, %v1175, %v1028
    %v1240 = vsel %vm1061, %v1176, %v1029
    %v1241 = vsel %vm1061, %v1177, %v1030
    %v1242 = vsel %vm1061, %v1178, %v1031
    %v1243 = vsel %vm1061, %v1179, %v1032
    %v1244 = vsel %vm1061, %v1180, %v1033
    %v1245 = vsel %vm1061, %v1181, %v1034
    %v1246 = vsel %vm1061, %v1182, %v1035
    %v1247 = vsel %vm1061, %v1183, %v1036
    %v1248 = vsel %vm1061, %v1184, %v1037
    %v1249 = vsel %vm1061, %v1185, %v1038
    %v1250 = vsel %vm1061, %v1186, %v1039
    %v1251 = vsel %vm1061, %v1187, %v1040
    %v1252 = vsel %vm1061, %v1188, %v1041
    %v1253 = vsel %vm1061, %v1189, %v1042
    %v1254 = vsel %vm1061, %v1190, %v1043
    %v1255 = vsel %vm1061, %v1191, %v1044
    %v1256 = vsel %vm1061, %v1192, %v1045
    %v1257 = vsel %vm1061, %v1193, %v1046
    %v1258 = vsel %vm1057, -inf, %v1047
    %v1259 = vsel %vm1058, -inf, %v1048
    %v1260 = vsel %vm1059, -inf, %v1049
    %v1261 = vsel %vm1060, -inf, %v1050
    %v1262 = vmax.f32 %v1258, %v1259
    %1263 = vmax.xlane.f32.xlu0 %v1262
    %v1264 = vpop.xlane.xlu0 %1263
    %v1265 = vmax.f32 %v1260, %v1261
    %1266 = vmax.xlane.f32.xlu0 %v1265
    %v1267 = vpop.xlane.xlu0 %1266
    %vm1268 = vcmp.eq.f32.partialorder %v1258, %v1264
    %vm1269 = vcmp.eq.f32.partialorder %v1259, %v1264
    %vm1270 = vcmp.eq.f32.partialorder %v1260, %v1267
    %vm1271 = vcmp.eq.f32.partialorder %v1261, %v1267
    %vm1272 = vcmp.eq.s32.totalorder %v198, 5
    %v1273 = vsel %vm1268, 1, 0
    %v1274 = vsel %vm1269, 1, 0
    %v1275 = vsel %vm1270, 1, 0
    %v1276 = vsel %vm1271, 1, 0
    %v1277 = vrot.slane %v1274, 7
    %v1278 = vrot.slane %v1276, 7
    %v1279 = vsel %vm216, %v1273, %v1277
    %v1280 = vsel %vm218, %v1273, %v1277
    %v1281 = vrot.slane %v1280, 1
    %v1282 = vsel %vm221, %v1273, %v1277
    %v1283 = vrot.slane %v1282, 2
    %v1284 = vsel %vm224, %v1273, %v1277
    %v1285 = vrot.slane %v1284, 3
    %v1286 = vsel %vm227, %v1273, %v1277
    %v1287 = vrot.slane %v1286, 4
    %v1288 = vsel %vm230, %v1273, %v1277
    %v1289 = vrot.slane %v1288, 5
    %v1290 = vsel %vm233, %v1273, %v1277
    %v1291 = vrot.slane %v1290, 6
    %v1292 = vsel %vm236, %v1277, %v1273
    %v1293 = vrot.slane %v1292, 7
    %v1294 = vsel %vm216, %v1275, %v1278
    %v1295 = vsel %vm218, %v1275, %v1278
    %v1296 = vrot.slane %v1295, 1
    %v1297 = vsel %vm221, %v1275, %v1278
    %v1298 = vrot.slane %v1297, 2
    %v1299 = vsel %vm224, %v1275, %v1278
    %v1300 = vrot.slane %v1299, 3
    %v1301 = vsel %vm227, %v1275, %v1278
    %v1302 = vrot.slane %v1301, 4
    %v1303 = vsel %vm230, %v1275, %v1278
    %v1304 = vrot.slane %v1303, 5
    %v1305 = vsel %vm233, %v1275, %v1278
    %v1306 = vrot.slane %v1305, 6
    %v1307 = vsel %vm236, %v1278, %v1275
    %v1308 = vrot.slane %v1307, 7
    %vm1309 = vcmp.ne.s32.totalorder %v1279, 0
    %vm1310 = vcmp.ne.s32.totalorder %v1281, 0
    %vm1311 = vcmp.ne.s32.totalorder %v1283, 0
    %vm1312 = vcmp.ne.s32.totalorder %v1285, 0
    %vm1313 = vcmp.ne.s32.totalorder %v1287, 0
    %vm1314 = vcmp.ne.s32.totalorder %v1289, 0
    %vm1315 = vcmp.ne.s32.totalorder %v1291, 0
    %vm1316 = vcmp.ne.s32.totalorder %v1293, 0
    %vm1317 = vcmp.ne.s32.totalorder %v1294, 0
    %vm1318 = vcmp.ne.s32.totalorder %v1296, 0
    %vm1319 = vcmp.ne.s32.totalorder %v1298, 0
    %vm1320 = vcmp.ne.s32.totalorder %v1300, 0
    %vm1321 = vcmp.ne.s32.totalorder %v1302, 0
    %vm1322 = vcmp.ne.s32.totalorder %v1304, 0
    %vm1323 = vcmp.ne.s32.totalorder %v1306, 0
    %vm1324 = vcmp.ne.s32.totalorder %v1308, 0
    %v1325 = vsel %vm1309, 1, 0
    %v1326 = vsel %vm1310, 1, 0
    %v1327 = vsel %vm1311, 1, 0
    %v1328 = vsel %vm1312, 1, 0
    %v1329 = vsel %vm1313, 1, 0
    %v1330 = vsel %vm1314, 1, 0
    %v1331 = vsel %vm1315, 1, 0
    %v1332 = vsel %vm1316, 1, 0
    %v1333 = vsel %vm1317, 1, 0
    %v1334 = vsel %vm1318, 1, 0
    %v1335 = vsel %vm1319, 1, 0
    %v1336 = vsel %vm1320, 1, 0
    %v1337 = vsel %vm1321, 1, 0
    %v1338 = vsel %vm1322, 1, 0
    %v1339 = vsel %vm1323, 1, 0
    %v1340 = vsel %vm1324, 1, 0
    %v1341 = vcvt.s32.f32 %v1325
    %v1342 = vcvt.s32.f32 %v1326
    %v1343 = vcvt.s32.f32 %v1327
    %v1344 = vcvt.s32.f32 %v1328
    %v1345 = vcvt.s32.f32 %v1329
    %v1346 = vcvt.s32.f32 %v1330
    %v1347 = vcvt.s32.f32 %v1331
    %v1348 = vcvt.s32.f32 %v1332
    %v1349 = vcvt.s32.f32 %v1333
    %v1350 = vcvt.s32.f32 %v1334
    %v1351 = vcvt.s32.f32 %v1335
    %v1352 = vcvt.s32.f32 %v1336
    %v1353 = vcvt.s32.f32 %v1337
    %v1354 = vcvt.s32.f32 %v1338
    %v1355 = vcvt.s32.f32 %v1339
    %v1356 = vcvt.s32.f32 %v1340
    %v1373 = vperm.slane %v1341, 0
    %v1374 = vperm.slane %v1341, 1
    %v1375 = vperm.slane %v1342, 0
    %v1376 = vperm.slane %v1342, 1
    %v1377 = vperm.slane %v1343, 0
    %v1378 = vperm.slane %v1343, 1
    %v1379 = vperm.slane %v1344, 0
    %v1380 = vperm.slane %v1344, 1
    %v1381 = vperm.slane %v1345, 0
    %v1382 = vperm.slane %v1345, 1
    %v1383 = vperm.slane %v1346, 0
    %v1384 = vperm.slane %v1346, 1
    %v1385 = vperm.slane %v1347, 0
    %v1386 = vperm.slane %v1347, 1
    %v1387 = vperm.slane %v1348, 0
    %v1388 = vperm.slane %v1348, 1
    %v1389 = vperm.slane %v1349, 0
    %v1390 = vperm.slane %v1349, 1
    %v1391 = vperm.slane %v1350, 0
    %v1392 = vperm.slane %v1350, 1
    %v1393 = vperm.slane %v1351, 0
    %v1394 = vperm.slane %v1351, 1
    %v1395 = vperm.slane %v1352, 0
    %v1396 = vperm.slane %v1352, 1
    %v1397 = vperm.slane %v1353, 0
    %v1398 = vperm.slane %v1353, 1
    %v1399 = vperm.slane %v1354, 0
    %v1400 = vperm.slane %v1354, 1
    %v1401 = vperm.slane %v1355, 0
    %v1402 = vperm.slane %v1355, 1
    %v1403 = vperm.slane %v1356, 0
    %v1404 = vperm.slane %v1356, 1
    %v1437 = vsel %vm1272, %v1373, %v1226
    %v1438 = vsel %vm1272, %v1374, %v1227
    %v1439 = vsel %vm1272, %v1375, %v1228
    %v1440 = vsel %vm1272, %v1376, %v1229
    %v1441 = vsel %vm1272, %v1377, %v1230
    %v1442 = vsel %vm1272, %v1378, %v1231
    %v1443 = vsel %vm1272, %v1379, %v1232
    %v1444 = vsel %vm1272, %v1380, %v1233
    %v1445 = vsel %vm1272, %v1381, %v1234
    %v1446 = vsel %vm1272, %v1382, %v1235
    %v1447 = vsel %vm1272, %v1383, %v1236
    %v1448 = vsel %vm1272, %v1384, %v1237
    %v1449 = vsel %vm1272, %v1385, %v1238
    %v1450 = vsel %vm1272, %v1386, %v1239
    %v1451 = vsel %vm1272, %v1387, %v1240
    %v1452 = vsel %vm1272, %v1388, %v1241
    %v1453 = vsel %vm1272, %v1389, %v1242
    %v1454 = vsel %vm1272, %v1390, %v1243
    %v1455 = vsel %vm1272, %v1391, %v1244
    %v1456 = vsel %vm1272, %v1392, %v1245
    %v1457 = vsel %vm1272, %v1393, %v1246
    %v1458 = vsel %vm1272, %v1394, %v1247
    %v1459 = vsel %vm1272, %v1395, %v1248
    %v1460 = vsel %vm1272, %v1396, %v1249
    %v1461 = vsel %vm1272, %v1397, %v1250
    %v1462 = vsel %vm1272, %v1398, %v1251
    %v1463 = vsel %vm1272, %v1399, %v1252
    %v1464 = vsel %vm1272, %v1400, %v1253
    %v1465 = vsel %vm1272, %v1401, %v1254
    %v1466 = vsel %vm1272, %v1402, %v1255
    %v1467 = vsel %vm1272, %v1403, %v1256
    %v1468 = vsel %vm1272, %v1404, %v1257
    %v1469 = vsel %vm1268, -inf, %v1258
    %v1470 = vsel %vm1269, -inf, %v1259
    %v1471 = vsel %vm1270, -inf, %v1260
    %v1472 = vsel %vm1271, -inf, %v1261
    %v1473 = vmax.f32 %v1469, %v1470
    %1474 = vmax.xlane.f32.xlu0 %v1473
    %v1475 = vpop.xlane.xlu0 %1474
    %v1476 = vmax.f32 %v1471, %v1472
    %1477 = vmax.xlane.f32.xlu0 %v1476
    %v1478 = vpop.xlane.xlu0 %1477
    %vm1479 = vcmp.eq.f32.partialorder %v1469, %v1475
    %vm1480 = vcmp.eq.f32.partialorder %v1470, %v1475
    %vm1481 = vcmp.eq.f32.partialorder %v1471, %v1478
    %vm1482 = vcmp.eq.f32.partialorder %v1472, %v1478
    %vm1483 = vcmp.eq.s32.totalorder %v198, 6
    %v1484 = vsel %vm1479, 1, 0
    %v1485 = vsel %vm1480, 1, 0
    %v1486 = vsel %vm1481, 1, 0
    %v1487 = vsel %vm1482, 1, 0
    %v1488 = vrot.slane %v1485, 7
    %v1489 = vrot.slane %v1487, 7
    %v1490 = vsel %vm216, %v1484, %v1488
    %v1491 = vsel %vm218, %v1484, %v1488
    %v1492 = vrot.slane %v1491, 1
    %v1493 = vsel %vm221, %v1484, %v1488
    %v1494 = vrot.slane %v1493, 2
    %v1495 = vsel %vm224, %v1484, %v1488
    %v1496 = vrot.slane %v1495, 3
    %v1497 = vsel %vm227, %v1484, %v1488
    %v1498 = vrot.slane %v1497, 4
    %v1499 = vsel %vm230, %v1484, %v1488
    %v1500 = vrot.slane %v1499, 5
    %v1501 = vsel %vm233, %v1484, %v1488
    %v1502 = vrot.slane %v1501, 6
    %v1503 = vsel %vm236, %v1488, %v1484
    %v1504 = vrot.slane %v1503, 7
    %v1505 = vsel %vm216, %v1486, %v1489
    %v1506 = vsel %vm218, %v1486, %v1489
    %v1507 = vrot.slane %v1506, 1
    %v1508 = vsel %vm221, %v1486, %v1489
    %v1509 = vrot.slane %v1508, 2
    %v1510 = vsel %vm224, %v1486, %v1489
    %v1511 = vrot.slane %v1510, 3
    %v1512 = vsel %vm227, %v1486, %v1489
    %v1513 = vrot.slane %v1512, 4
    %v1514 = vsel %vm230, %v1486, %v1489
    %v1515 = vrot.slane %v1514, 5
    %v1516 = vsel %vm233, %v1486, %v1489
    %v1517 = vrot.slane %v1516, 6
    %v1518 = vsel %vm236, %v1489, %v1486
    %v1519 = vrot.slane %v1518, 7
    %vm1520 = vcmp.ne.s32.totalorder %v1490, 0
    %vm1521 = vcmp.ne.s32.totalorder %v1492, 0
    %vm1522 = vcmp.ne.s32.totalorder %v1494, 0
    %vm1523 = vcmp.ne.s32.totalorder %v1496, 0
    %vm1524 = vcmp.ne.s32.totalorder %v1498, 0
    %vm1525 = vcmp.ne.s32.totalorder %v1500, 0
    %vm1526 = vcmp.ne.s32.totalorder %v1502, 0
    %vm1527 = vcmp.ne.s32.totalorder %v1504, 0
    %vm1528 = vcmp.ne.s32.totalorder %v1505, 0
    %vm1529 = vcmp.ne.s32.totalorder %v1507, 0
    %vm1530 = vcmp.ne.s32.totalorder %v1509, 0
    %vm1531 = vcmp.ne.s32.totalorder %v1511, 0
    %vm1532 = vcmp.ne.s32.totalorder %v1513, 0
    %vm1533 = vcmp.ne.s32.totalorder %v1515, 0
    %vm1534 = vcmp.ne.s32.totalorder %v1517, 0
    %vm1535 = vcmp.ne.s32.totalorder %v1519, 0
    %v1536 = vsel %vm1520, 1, 0
    %v1537 = vsel %vm1521, 1, 0
    %v1538 = vsel %vm1522, 1, 0
    %v1539 = vsel %vm1523, 1, 0
    %v1540 = vsel %vm1524, 1, 0
    %v1541 = vsel %vm1525, 1, 0
    %v1542 = vsel %vm1526, 1, 0
    %v1543 = vsel %vm1527, 1, 0
    %v1544 = vsel %vm1528, 1, 0
    %v1545 = vsel %vm1529, 1, 0
    %v1546 = vsel %vm1530, 1, 0
    %v1547 = vsel %vm1531, 1, 0
    %v1548 = vsel %vm1532, 1, 0
    %v1549 = vsel %vm1533, 1, 0
    %v1550 = vsel %vm1534, 1, 0
    %v1551 = vsel %vm1535, 1, 0
    %v1552 = vcvt.s32.f32 %v1536
    %v1553 = vcvt.s32.f32 %v1537
    %v1554 = vcvt.s32.f32 %v1538
    %v1555 = vcvt.s32.f32 %v1539
    %v1556 = vcvt.s32.f32 %v1540
    %v1557 = vcvt.s32.f32 %v1541
    %v1558 = vcvt.s32.f32 %v1542
    %v1559 = vcvt.s32.f32 %v1543
    %v1560 = vcvt.s32.f32 %v1544
    %v1561 = vcvt.s32.f32 %v1545
    %v1562 = vcvt.s32.f32 %v1546
    %v1563 = vcvt.s32.f32 %v1547
    %v1564 = vcvt.s32.f32 %v1548
    %v1565 = vcvt.s32.f32 %v1549
    %v1566 = vcvt.s32.f32 %v1550
    %v1567 = vcvt.s32.f32 %v1551
    %v1584 = vperm.slane %v1552, 0
    %v1585 = vperm.slane %v1552, 1
    %v1586 = vperm.slane %v1553, 0
    %v1587 = vperm.slane %v1553, 1
    %v1588 = vperm.slane %v1554, 0
    %v1589 = vperm.slane %v1554, 1
    %v1590 = vperm.slane %v1555, 0
    %v1591 = vperm.slane %v1555, 1
    %v1592 = vperm.slane %v1556, 0
    %v1593 = vperm.slane %v1556, 1
    %v1594 = vperm.slane %v1557, 0
    %v1595 = vperm.slane %v1557, 1
    %v1596 = vperm.slane %v1558, 0
    %v1597 = vperm.slane %v1558, 1
    %v1598 = vperm.slane %v1559, 0
    %v1599 = vperm.slane %v1559, 1
    %v1600 = vperm.slane %v1560, 0
    %v1601 = vperm.slane %v1560, 1
    %v1602 = vperm.slane %v1561, 0
    %v1603 = vperm.slane %v1561, 1
    %v1604 = vperm.slane %v1562, 0
    %v1605 = vperm.slane %v1562, 1
    %v1606 = vperm.slane %v1563, 0
    %v1607 = vperm.slane %v1563, 1
    %v1608 = vperm.slane %v1564, 0
    %v1609 = vperm.slane %v1564, 1
    %v1610 = vperm.slane %v1565, 0
    %v1611 = vperm.slane %v1565, 1
    %v1612 = vperm.slane %v1566, 0
    %v1613 = vperm.slane %v1566, 1
    %v1614 = vperm.slane %v1567, 0
    %v1615 = vperm.slane %v1567, 1
    %v1648 = vsel %vm1483, %v1584, %v1437
    %v1649 = vsel %vm1483, %v1585, %v1438
    %v1650 = vsel %vm1483, %v1586, %v1439
    %v1651 = vsel %vm1483, %v1587, %v1440
    %v1652 = vsel %vm1483, %v1588, %v1441
    %v1653 = vsel %vm1483, %v1589, %v1442
    %v1654 = vsel %vm1483, %v1590, %v1443
    %v1655 = vsel %vm1483, %v1591, %v1444
    %v1656 = vsel %vm1483, %v1592, %v1445
    %v1657 = vsel %vm1483, %v1593, %v1446
    %v1658 = vsel %vm1483, %v1594, %v1447
    %v1659 = vsel %vm1483, %v1595, %v1448
    %v1660 = vsel %vm1483, %v1596, %v1449
    %v1661 = vsel %vm1483, %v1597, %v1450
    %v1662 = vsel %vm1483, %v1598, %v1451
    %v1663 = vsel %vm1483, %v1599, %v1452
    %v1664 = vsel %vm1483, %v1600, %v1453
    %v1665 = vsel %vm1483, %v1601, %v1454
    %v1666 = vsel %vm1483, %v1602, %v1455
    %v1667 = vsel %vm1483, %v1603, %v1456
    %v1668 = vsel %vm1483, %v1604, %v1457
    %v1669 = vsel %vm1483, %v1605, %v1458
    %v1670 = vsel %vm1483, %v1606, %v1459
    %v1671 = vsel %vm1483, %v1607, %v1460
    %v1672 = vsel %vm1483, %v1608, %v1461
    %v1673 = vsel %vm1483, %v1609, %v1462
    %v1674 = vsel %vm1483, %v1610, %v1463
    %v1675 = vsel %vm1483, %v1611, %v1464
    %v1676 = vsel %vm1483, %v1612, %v1465
    %v1677 = vsel %vm1483, %v1613, %v1466
    %v1678 = vsel %vm1483, %v1614, %v1467
    %v1679 = vsel %vm1483, %v1615, %v1468
    %v1680 = vsel %vm1479, -inf, %v1469
    %v1681 = vsel %vm1480, -inf, %v1470
    %v1682 = vsel %vm1481, -inf, %v1471
    %v1683 = vsel %vm1482, -inf, %v1472
    %v1684 = vmax.f32 %v1680, %v1681
    %1685 = vmax.xlane.f32.xlu0 %v1684
    %v1686 = vpop.xlane.xlu0 %1685
    %v1687 = vmax.f32 %v1682, %v1683
    %1688 = vmax.xlane.f32.xlu0 %v1687
    %v1689 = vpop.xlane.xlu0 %1688
    %vm1690 = vcmp.eq.f32.partialorder %v1680, %v1686
    %vm1691 = vcmp.eq.f32.partialorder %v1681, %v1686
    %vm1692 = vcmp.eq.f32.partialorder %v1682, %v1689
    %vm1693 = vcmp.eq.f32.partialorder %v1683, %v1689
    %vm1694 = vcmp.eq.s32.totalorder %v198, 7
    %v1695 = vsel %vm1690, 1, 0
    %v1696 = vsel %vm1691, 1, 0
    %v1697 = vsel %vm1692, 1, 0
    %v1698 = vsel %vm1693, 1, 0
    %v1699 = vrot.slane %v1696, 7
    %v1700 = vrot.slane %v1698, 7
    %v1701 = vsel %vm216, %v1695, %v1699
    %v1702 = vsel %vm218, %v1695, %v1699
    %v1703 = vrot.slane %v1702, 1
    %v1704 = vsel %vm221, %v1695, %v1699
    %v1705 = vrot.slane %v1704, 2
    %v1706 = vsel %vm224, %v1695, %v1699
    %v1707 = vrot.slane %v1706, 3
    %v1708 = vsel %vm227, %v1695, %v1699
    %v1709 = vrot.slane %v1708, 4
    %v1710 = vsel %vm230, %v1695, %v1699
    %v1711 = vrot.slane %v1710, 5
    %v1712 = vsel %vm233, %v1695, %v1699
    %v1713 = vrot.slane %v1712, 6
    %v1714 = vsel %vm236, %v1699, %v1695
    %v1715 = vrot.slane %v1714, 7
    %v1716 = vsel %vm216, %v1697, %v1700
    %v1717 = vsel %vm218, %v1697, %v1700
    %v1718 = vrot.slane %v1717, 1
    %v1719 = vsel %vm221, %v1697, %v1700
    %v1720 = vrot.slane %v1719, 2
    %v1721 = vsel %vm224, %v1697, %v1700
    %v1722 = vrot.slane %v1721, 3
    %v1723 = vsel %vm227, %v1697, %v1700
    %v1724 = vrot.slane %v1723, 4
    %v1725 = vsel %vm230, %v1697, %v1700
    %v1726 = vrot.slane %v1725, 5
    %v1727 = vsel %vm233, %v1697, %v1700
    %v1728 = vrot.slane %v1727, 6
    %v1729 = vsel %vm236, %v1700, %v1697
    %v1730 = vrot.slane %v1729, 7
    %vm1731 = vcmp.ne.s32.totalorder %v1701, 0
    %vm1732 = vcmp.ne.s32.totalorder %v1703, 0
    %vm1733 = vcmp.ne.s32.totalorder %v1705, 0
    %vm1734 = vcmp.ne.s32.totalorder %v1707, 0
    %vm1735 = vcmp.ne.s32.totalorder %v1709, 0
    %vm1736 = vcmp.ne.s32.totalorder %v1711, 0
    %vm1737 = vcmp.ne.s32.totalorder %v1713, 0
    %vm1738 = vcmp.ne.s32.totalorder %v1715, 0
    %vm1739 = vcmp.ne.s32.totalorder %v1716, 0
    %vm1740 = vcmp.ne.s32.totalorder %v1718, 0
    %vm1741 = vcmp.ne.s32.totalorder %v1720, 0
    %vm1742 = vcmp.ne.s32.totalorder %v1722, 0
    %vm1743 = vcmp.ne.s32.totalorder %v1724, 0
    %vm1744 = vcmp.ne.s32.totalorder %v1726, 0
    %vm1745 = vcmp.ne.s32.totalorder %v1728, 0
    %vm1746 = vcmp.ne.s32.totalorder %v1730, 0
    %v1747 = vsel %vm1731, 1, 0
    %v1748 = vsel %vm1732, 1, 0
    %v1749 = vsel %vm1733, 1, 0
    %v1750 = vsel %vm1734, 1, 0
    %v1751 = vsel %vm1735, 1, 0
    %v1752 = vsel %vm1736, 1, 0
    %v1753 = vsel %vm1737, 1, 0
    %v1754 = vsel %vm1738, 1, 0
    %v1755 = vsel %vm1739, 1, 0
    %v1756 = vsel %vm1740, 1, 0
    %v1757 = vsel %vm1741, 1, 0
    %v1758 = vsel %vm1742, 1, 0
    %v1759 = vsel %vm1743, 1, 0
    %v1760 = vsel %vm1744, 1, 0
    %v1761 = vsel %vm1745, 1, 0
    %v1762 = vsel %vm1746, 1, 0
    %v1763 = vcvt.s32.f32 %v1747
    %v1764 = vcvt.s32.f32 %v1748
    %v1765 = vcvt.s32.f32 %v1749
    %v1766 = vcvt.s32.f32 %v1750
    %v1767 = vcvt.s32.f32 %v1751
    %v1768 = vcvt.s32.f32 %v1752
    %v1769 = vcvt.s32.f32 %v1753
    %v1770 = vcvt.s32.f32 %v1754
    %v1771 = vcvt.s32.f32 %v1755
    %v1772 = vcvt.s32.f32 %v1756
    %v1773 = vcvt.s32.f32 %v1757
    %v1774 = vcvt.s32.f32 %v1758
    %v1775 = vcvt.s32.f32 %v1759
    %v1776 = vcvt.s32.f32 %v1760
    %v1777 = vcvt.s32.f32 %v1761
    %v1778 = vcvt.s32.f32 %v1762
    %v1795 = vperm.slane %v1763, 0
    %v1796 = vperm.slane %v1763, 1
    %v1797 = vperm.slane %v1764, 0
    %v1798 = vperm.slane %v1764, 1
    %v1799 = vperm.slane %v1765, 0
    %v1800 = vperm.slane %v1765, 1
    %v1801 = vperm.slane %v1766, 0
    %v1802 = vperm.slane %v1766, 1
    %v1803 = vperm.slane %v1767, 0
    %v1804 = vperm.slane %v1767, 1
    %v1805 = vperm.slane %v1768, 0
    %v1806 = vperm.slane %v1768, 1
    %v1807 = vperm.slane %v1769, 0
    %v1808 = vperm.slane %v1769, 1
    %v1809 = vperm.slane %v1770, 0
    %v1810 = vperm.slane %v1770, 1
    %v1811 = vperm.slane %v1771, 0
    %v1812 = vperm.slane %v1771, 1
    %v1813 = vperm.slane %v1772, 0
    %v1814 = vperm.slane %v1772, 1
    %v1815 = vperm.slane %v1773, 0
    %v1816 = vperm.slane %v1773, 1
    %v1817 = vperm.slane %v1774, 0
    %v1818 = vperm.slane %v1774, 1
    %v1819 = vperm.slane %v1775, 0
    %v1820 = vperm.slane %v1775, 1
    %v1821 = vperm.slane %v1776, 0
    %v1822 = vperm.slane %v1776, 1
    %v1823 = vperm.slane %v1777, 0
    %v1824 = vperm.slane %v1777, 1
    %v1825 = vperm.slane %v1778, 0
    %v1826 = vperm.slane %v1778, 1
    %v1859 = vsel %vm1694, %v1795, %v1648
    %v1860 = vsel %vm1694, %v1796, %v1649
    %v1861 = vsel %vm1694, %v1797, %v1650
    %v1862 = vsel %vm1694, %v1798, %v1651
    %v1863 = vsel %vm1694, %v1799, %v1652
    %v1864 = vsel %vm1694, %v1800, %v1653
    %v1865 = vsel %vm1694, %v1801, %v1654
    %v1866 = vsel %vm1694, %v1802, %v1655
    %v1867 = vsel %vm1694, %v1803, %v1656
    %v1868 = vsel %vm1694, %v1804, %v1657
    %v1869 = vsel %vm1694, %v1805, %v1658
    %v1870 = vsel %vm1694, %v1806, %v1659
    %v1871 = vsel %vm1694, %v1807, %v1660
    %v1872 = vsel %vm1694, %v1808, %v1661
    %v1873 = vsel %vm1694, %v1809, %v1662
    %v1874 = vsel %vm1694, %v1810, %v1663
    %v1875 = vsel %vm1694, %v1811, %v1664
    %v1876 = vsel %vm1694, %v1812, %v1665
    %v1877 = vsel %vm1694, %v1813, %v1666
    %v1878 = vsel %vm1694, %v1814, %v1667
    %v1879 = vsel %vm1694, %v1815, %v1668
    %v1880 = vsel %vm1694, %v1816, %v1669
    %v1881 = vsel %vm1694, %v1817, %v1670
    %v1882 = vsel %vm1694, %v1818, %v1671
    %v1883 = vsel %vm1694, %v1819, %v1672
    %v1884 = vsel %vm1694, %v1820, %v1673
    %v1885 = vsel %vm1694, %v1821, %v1674
    %v1886 = vsel %vm1694, %v1822, %v1675
    %v1887 = vsel %vm1694, %v1823, %v1676
    %v1888 = vsel %vm1694, %v1824, %v1677
    %v1889 = vsel %vm1694, %v1825, %v1678
    %v1890 = vsel %vm1694, %v1826, %v1679
    %1891 = vmatpush.msra.mxu0 %v65
    %1892 = vmatpush.msra.mxu0 %v64
    %1893 = vmatpush.msra.mxu0 %v63
    %1894 = vmatpush.msra.mxu0 %v62
    %1895 = vmatpush.msra.mxu0 %v61
    %1896 = vmatpush.msra.mxu0 %v60
    %1897 = vmatpush.msra.mxu0 %v59
    %1898 = vmatpush.msra.mxu0 %v58
    %1899 = vmatpush.msra.mxu0 %v57
    %1900 = vmatpush.msra.mxu0 %v56
    %1901 = vmatpush.msra.mxu0 %v55
    %1902 = vmatpush.msra.mxu0 %v54
    %1903 = vmatpush.msra.mxu0 %v53
    %1904 = vmatpush.msra.mxu0 %v52
    %1905 = vmatpush.msra.mxu0 %v51
    %1906 = vmatpush.msra.mxu0 %v50
    %1907 = vmatmul.f32.gmra.mxu0 %v1859
    %v1908 = vpop.f32.mrf.mxu0
    %v1909 = vadd.f32 0.0, %v1908
    %1910 = vmatmul.f32.gmra.mxu0 %v1861
    %v1911 = vpop.f32.mrf.mxu0
    %v1912 = vadd.f32 0.0, %v1911
    %1913 = vmatmul.f32.gmra.mxu0 %v1863
    %v1914 = vpop.f32.mrf.mxu0
    %v1915 = vadd.f32 0.0, %v1914
    %1916 = vmatmul.f32.gmra.mxu0 %v1865
    %v1917 = vpop.f32.mrf.mxu0
    %v1918 = vadd.f32 0.0, %v1917
    %1919 = vmatmul.f32.gmra.mxu0 %v1867
    %v1920 = vpop.f32.mrf.mxu0
    %v1921 = vadd.f32 0.0, %v1920
    %1922 = vmatmul.f32.gmra.mxu0 %v1869
    %v1923 = vpop.f32.mrf.mxu0
    %v1924 = vadd.f32 0.0, %v1923
    %1925 = vmatmul.f32.gmra.mxu0 %v1871
    %v1926 = vpop.f32.mrf.mxu0
    %v1927 = vadd.f32 0.0, %v1926
    %1928 = vmatmul.f32.gmra.mxu0 %v1873
    %v1929 = vpop.f32.mrf.mxu0
    %v1930 = vadd.f32 0.0, %v1929
    %1931 = vmatmul.f32.gmra.mxu0 %v1875
    %v1932 = vpop.f32.mrf.mxu0
    %v1933 = vadd.f32 0.0, %v1932
    %1934 = vmatmul.f32.gmra.mxu0 %v1877
    %v1935 = vpop.f32.mrf.mxu0
    %v1936 = vadd.f32 0.0, %v1935
    %1937 = vmatmul.f32.gmra.mxu0 %v1879
    %v1938 = vpop.f32.mrf.mxu0
    %v1939 = vadd.f32 0.0, %v1938
    %1940 = vmatmul.f32.gmra.mxu0 %v1881
    %v1941 = vpop.f32.mrf.mxu0
    %v1942 = vadd.f32 0.0, %v1941
    %1943 = vmatmul.f32.gmra.mxu0 %v1883
    %v1944 = vpop.f32.mrf.mxu0
    %v1945 = vadd.f32 0.0, %v1944
    %1946 = vmatmul.f32.gmra.mxu0 %v1885
    %v1947 = vpop.f32.mrf.mxu0
    %v1948 = vadd.f32 0.0, %v1947
    %1949 = vmatmul.f32.gmra.mxu0 %v1887
    %v1950 = vpop.f32.mrf.mxu0
    %v1951 = vadd.f32 0.0, %v1950
    %1952 = vmatmul.f32.gmra.mxu0 %v1889
    %v1953 = vpop.f32.mrf.mxu0
    %v1954 = vadd.f32 0.0, %v1953
    %1955 = vdwg.mxu0
    %1956 = vmatpush.msra.mxu0 %v81
    %1957 = vmatpush.msra.mxu0 %v80
    %1958 = vmatpush.msra.mxu0 %v79
    %1959 = vmatpush.msra.mxu0 %v78
    %1960 = vmatpush.msra.mxu0 %v77
    %1961 = vmatpush.msra.mxu0 %v76
    %1962 = vmatpush.msra.mxu0 %v75
    %1963 = vmatpush.msra.mxu0 %v74
    %1964 = vmatpush.msra.mxu0 %v73
    %1965 = vmatpush.msra.mxu0 %v72
    %1966 = vmatpush.msra.mxu0 %v71
    %1967 = vmatpush.msra.mxu0 %v70
    %1968 = vmatpush.msra.mxu0 %v69
    %1969 = vmatpush.msra.mxu0 %v68
    %1970 = vmatpush.msra.mxu0 %v67
    %1971 = vmatpush.msra.mxu0 %v66
    %1972 = vmatmul.f32.gmra.mxu0 %v1860
    %v1973 = vpop.f32.mrf.mxu0
    %v1974 = vadd.f32 %v1909, %v1973
    %1975 = vmatmul.f32.gmra.mxu0 %v1862
    %v1976 = vpop.f32.mrf.mxu0
    %v1977 = vadd.f32 %v1912, %v1976
    %1978 = vmatmul.f32.gmra.mxu0 %v1864
    %v1979 = vpop.f32.mrf.mxu0
    %v1980 = vadd.f32 %v1915, %v1979
    %1981 = vmatmul.f32.gmra.mxu0 %v1866
    %v1982 = vpop.f32.mrf.mxu0
    %v1983 = vadd.f32 %v1918, %v1982
    %1984 = vmatmul.f32.gmra.mxu0 %v1868
    %v1985 = vpop.f32.mrf.mxu0
    %v1986 = vadd.f32 %v1921, %v1985
    %1987 = vmatmul.f32.gmra.mxu0 %v1870
    %v1988 = vpop.f32.mrf.mxu0
    %v1989 = vadd.f32 %v1924, %v1988
    %1990 = vmatmul.f32.gmra.mxu0 %v1872
    %v1991 = vpop.f32.mrf.mxu0
    %v1992 = vadd.f32 %v1927, %v1991
    %1993 = vmatmul.f32.gmra.mxu0 %v1874
    %v1994 = vpop.f32.mrf.mxu0
    %v1995 = vadd.f32 %v1930, %v1994
    %1996 = vmatmul.f32.gmra.mxu0 %v1876
    %v1997 = vpop.f32.mrf.mxu0
    %v1998 = vadd.f32 %v1933, %v1997
    %1999 = vmatmul.f32.gmra.mxu0 %v1878
    %v2000 = vpop.f32.mrf.mxu0
    %v2001 = vadd.f32 %v1936, %v2000
    %2002 = vmatmul.f32.gmra.mxu0 %v1880
    %v2003 = vpop.f32.mrf.mxu0
    %v2004 = vadd.f32 %v1939, %v2003
    %2005 = vmatmul.f32.gmra.mxu0 %v1882
    %v2006 = vpop.f32.mrf.mxu0
    %v2007 = vadd.f32 %v1942, %v2006
    %2008 = vmatmul.f32.gmra.mxu0 %v1884
    %v2009 = vpop.f32.mrf.mxu0
    %v2010 = vadd.f32 %v1945, %v2009
    %2011 = vmatmul.f32.gmra.mxu0 %v1886
    %v2012 = vpop.f32.mrf.mxu0
    %v2013 = vadd.f32 %v1948, %v2012
    %2014 = vmatmul.f32.gmra.mxu0 %v1888
    %v2015 = vpop.f32.mrf.mxu0
    %v2016 = vadd.f32 %v1951, %v2015
    %2017 = vmatmul.f32.gmra.mxu0 %v1890
    %v2018 = vpop.f32.mrf.mxu0
    %v2019 = vadd.f32 %v1954, %v2018
    %2020 = vdwg.mxu0
    %v2021 = vpack.c.bf16 %v1977, %v1974
    %v2022 = vpack.c.bf16 %v1983, %v1980
    %v2023 = vpack.c.bf16 %v1989, %v1986
    %v2024 = vpack.c.bf16 %v1995, %v1992
    %v2025 = vpack.c.bf16 %v2001, %v1998
    %v2026 = vpack.c.bf16 %v2007, %v2004
    %v2027 = vpack.c.bf16 %v2013, %v2010
    %v2028 = vpack.c.bf16 %v2019, %v2016
    %v2029 = vld [vmem:[#allocation5] sm:$0xff]
    %v2030 = vld [vmem:[#allocation5 + $0x8] sm:$0xff]
    %v2031 = vld [vmem:[#allocation5 + $0x10] sm:$0xff]
    %v2032 = vld [vmem:[#allocation5 + $0x18] sm:$0xff]
    %v2033 = vld [vmem:[#allocation5 + $0x20] sm:$0xff]
    %v2034 = vld [vmem:[#allocation5 + $0x28] sm:$0xff]
    %v2035 = vld [vmem:[#allocation5 + $0x30] sm:$0xff]
    %v2036 = vld [vmem:[#allocation5 + $0x38] sm:$0xff]
    %v2037 = vld [vmem:[#allocation5 + $0x40] sm:$0xff]
    %v2038 = vld [vmem:[#allocation5 + $0x48] sm:$0xff]
    %v2039 = vld [vmem:[#allocation5 + $0x50] sm:$0xff]
    %v2040 = vld [vmem:[#allocation5 + $0x58] sm:$0xff]
    %v2041 = vld [vmem:[#allocation5 + $0x60] sm:$0xff]
    %v2042 = vld [vmem:[#allocation5 + $0x68] sm:$0xff]
    %v2043 = vld [vmem:[#allocation5 + $0x70] sm:$0xff]
    %v2044 = vld [vmem:[#allocation5 + $0x78] sm:$0xff]
    %v2045 = vpack.c.bf16 %v2030, %v2029
    %v2046 = vpack.c.bf16 %v2032, %v2031
    %v2047 = vpack.c.bf16 %v2034, %v2033
    %v2048 = vpack.c.bf16 %v2036, %v2035
    %v2049 = vpack.c.bf16 %v2038, %v2037
    %v2050 = vpack.c.bf16 %v2040, %v2039
    %v2051 = vpack.c.bf16 %v2042, %v2041
    %v2052 = vpack.c.bf16 %v2044, %v2043
    %2053 = vmatpush.bf16.msra.mxu0 %v2052
    %2054 = vmatpush.bf16.msra.mxu0 %v2051
    %2055 = vmatpush.bf16.msra.mxu0 %v2050
    %2056 = vmatpush.bf16.msra.mxu0 %v2049
    %2057 = vmatpush.bf16.msra.mxu0 %v2048
    %2058 = vmatpush.bf16.msra.mxu0 %v2047
    %2059 = vmatpush.bf16.msra.mxu0 %v2046
    %2060 = vmatpush.bf16.msra.mxu0 %v2045
    %2061 = vmatmul.bf16.gmra.mxu0 %v2021
    %v2062 = vpop.f32.mrf.mxu0
    %v2063 = vadd.f32 0.0, %v2062
    %v2064 = vpop.f32.mrf.mxu0
    %v2065 = vadd.f32 0.0, %v2064
    %2066 = vmatmul.bf16.gmra.mxu0 %v2022
    %v2067 = vpop.f32.mrf.mxu0
    %v2068 = vadd.f32 0.0, %v2067
    %v2069 = vpop.f32.mrf.mxu0
    %v2070 = vadd.f32 0.0, %v2069
    %2071 = vmatmul.bf16.gmra.mxu0 %v2023
    %v2072 = vpop.f32.mrf.mxu0
    %v2073 = vadd.f32 0.0, %v2072
    %v2074 = vpop.f32.mrf.mxu0
    %v2075 = vadd.f32 0.0, %v2074
    %2076 = vmatmul.bf16.gmra.mxu0 %v2024
    %v2077 = vpop.f32.mrf.mxu0
    %v2078 = vadd.f32 0.0, %v2077
    %v2079 = vpop.f32.mrf.mxu0
    %v2080 = vadd.f32 0.0, %v2079
    %2081 = vmatmul.bf16.gmra.mxu0 %v2025
    %v2082 = vpop.f32.mrf.mxu0
    %v2083 = vadd.f32 0.0, %v2082
    %v2084 = vpop.f32.mrf.mxu0
    %v2085 = vadd.f32 0.0, %v2084
    %2086 = vmatmul.bf16.gmra.mxu0 %v2026
    %v2087 = vpop.f32.mrf.mxu0
    %v2088 = vadd.f32 0.0, %v2087
    %v2089 = vpop.f32.mrf.mxu0
    %v2090 = vadd.f32 0.0, %v2089
    %2091 = vmatmul.bf16.gmra.mxu0 %v2027
    %v2092 = vpop.f32.mrf.mxu0
    %v2093 = vadd.f32 0.0, %v2092
    %v2094 = vpop.f32.mrf.mxu0
    %v2095 = vadd.f32 0.0, %v2094
    %2096 = vmatmul.bf16.gmra.mxu0 %v2028
    %v2097 = vpop.f32.mrf.mxu0
    %v2098 = vadd.f32 0.0, %v2097
    %v2099 = vpop.f32.mrf.mxu0
    %v2100 = vadd.f32 0.0, %v2099
    %2101 = vdwg.mxu0
    %v2102 = vtanh.pop %v2063
    %v2103 = vtanh.pop %v2065
    %v2104 = vtanh.pop %v2068
    %v2105 = vtanh.pop %v2070
    %v2106 = vtanh.pop %v2073
    %v2107 = vtanh.pop %v2075
    %v2108 = vtanh.pop %v2078
    %v2109 = vtanh.pop %v2080
    %v2110 = vtanh.pop %v2083
    %v2111 = vtanh.pop %v2085
    %v2112 = vtanh.pop %v2088
    %v2113 = vtanh.pop %v2090
    %v2114 = vtanh.pop %v2093
    %v2115 = vtanh.pop %v2095
    %v2116 = vtanh.pop %v2098
    %v2117 = vtanh.pop %v2100
    %v2118 = vld [vmem:[%s3] sm:$0x1]
    %v2120 = vperm.slane %v2118, 0
    %v2122 = vmul.f32 %v2102, %v2120
    %v2123 = vmul.f32 %v2103, %v2120
    %v2124 = vmul.f32 %v2104, %v2120
    %v2125 = vmul.f32 %v2105, %v2120
    %v2126 = vmul.f32 %v2106, %v2120
    %v2127 = vmul.f32 %v2107, %v2120
    %v2128 = vmul.f32 %v2108, %v2120
    %v2129 = vmul.f32 %v2109, %v2120
    %v2130 = vmul.f32 %v2110, %v2120
    %v2131 = vmul.f32 %v2111, %v2120
    %v2132 = vmul.f32 %v2112, %v2120
    %v2133 = vmul.f32 %v2113, %v2120
    %v2134 = vmul.f32 %v2114, %v2120
    %v2135 = vmul.f32 %v2115, %v2120
    %v2136 = vmul.f32 %v2116, %v2120
    %v2137 = vmul.f32 %v2117, %v2120
    %2138 = vadd.xlane.f32.xlu0 %v2122
    %v2139 = vpop.xlane.xlu0 %2138
    %2140 = vadd.xlane.f32.xlu0 %v2123
    %v2141 = vpop.xlane.xlu0 %2140
    %2142 = vadd.xlane.f32.xlu0 %v2124
    %v2143 = vpop.xlane.xlu0 %2142
    %2144 = vadd.xlane.f32.xlu0 %v2125
    %v2145 = vpop.xlane.xlu0 %2144
    %2146 = vadd.xlane.f32.xlu0 %v2126
    %v2147 = vpop.xlane.xlu0 %2146
    %2148 = vadd.xlane.f32.xlu0 %v2127
    %v2149 = vpop.xlane.xlu0 %2148
    %2150 = vadd.xlane.f32.xlu0 %v2128
    %v2151 = vpop.xlane.xlu0 %2150
    %2152 = vadd.xlane.f32.xlu0 %v2129
    %v2153 = vpop.xlane.xlu0 %2152
    %2154 = vadd.xlane.f32.xlu0 %v2130
    %v2155 = vpop.xlane.xlu0 %2154
    %2156 = vadd.xlane.f32.xlu0 %v2131
    %v2157 = vpop.xlane.xlu0 %2156
    %2158 = vadd.xlane.f32.xlu0 %v2132
    %v2159 = vpop.xlane.xlu0 %2158
    %2160 = vadd.xlane.f32.xlu0 %v2133
    %v2161 = vpop.xlane.xlu0 %2160
    %2162 = vadd.xlane.f32.xlu0 %v2134
    %v2163 = vpop.xlane.xlu0 %2162
    %2164 = vadd.xlane.f32.xlu0 %v2135
    %v2165 = vpop.xlane.xlu0 %2164
    %2166 = vadd.xlane.f32.xlu0 %v2136
    %v2167 = vpop.xlane.xlu0 %2166
    %2168 = vadd.xlane.f32.xlu0 %v2137
    %v2169 = vpop.xlane.xlu0 %2168
    %v2186 = vperm.slane %v2139, %v83
    %v2187 = vperm.slane %v2141, %v83
    %v2188 = vperm.slane %v2143, %v83
    %v2189 = vperm.slane %v2145, %v83
    %v2190 = vperm.slane %v2147, %v83
    %v2191 = vperm.slane %v2149, %v83
    %v2192 = vperm.slane %v2151, %v83
    %v2193 = vperm.slane %v2153, %v83
    %v2194 = vperm.slane %v2155, %v83
    %v2195 = vperm.slane %v2157, %v83
    %v2196 = vperm.slane %v2159, %v83
    %v2197 = vperm.slane %v2161, %v83
    %v2198 = vperm.slane %v2163, %v83
    %v2199 = vperm.slane %v2165, %v83
    %v2200 = vperm.slane %v2167, %v83
    %v2201 = vperm.slane %v2169, %v83
    %v2202 = vsel %vm218, %v2187, %v2186
    %v2203 = vsel %vm221, %v2188, %v2202
    %v2204 = vsel %vm224, %v2189, %v2203
    %v2205 = vsel %vm227, %v2190, %v2204
    %v2206 = vsel %vm230, %v2191, %v2205
    %v2207 = vsel %vm233, %v2192, %v2206
    %vm2208 = vcmask 1047559
    %v2209 = vsel %vm2208, %v2193, %v2207
    %v2210 = vsel %vm218, %v2195, %v2194
    %v2211 = vsel %vm221, %v2196, %v2210
    %v2212 = vsel %vm224, %v2197, %v2211
    %v2213 = vsel %vm227, %v2198, %v2212
    %v2214 = vsel %vm230, %v2199, %v2213
    %v2215 = vsel %vm233, %v2200, %v2214
    %v2216 = vsel %vm2208, %v2201, %v2215
    %vm2219 = vcmask 64512
    %v2220 = vsel %vm2219, %v2209, -inf
    %2221 = vmax.xlane.f32.xlu0 %v2220
    %v2222 = vpop.xlane.xlu0 %2221
    %v2223 = vsel %vm2219, %v2216, -inf
    %2224 = vmax.xlane.f32.xlu0 %v2223
    %v2225 = vpop.xlane.xlu0 %2224
    %v2228 = vperm.slane %v2222, 0
    %v2229 = vperm.slane %v2222, 1
    %v2230 = vperm.slane %v2222, 2
    %v2231 = vperm.slane %v2222, 3
    %v2232 = vperm.slane %v2222, 4
    %v2233 = vperm.slane %v2222, 5
    %v2234 = vperm.slane %v2222, 6
    %v2235 = vperm.slane %v2222, 7
    %v2236 = vperm.slane %v2225, 0
    %v2237 = vperm.slane %v2225, 1
    %v2238 = vperm.slane %v2225, 2
    %v2239 = vperm.slane %v2225, 3
    %v2240 = vperm.slane %v2225, 4
    %v2241 = vperm.slane %v2225, 5
    %v2242 = vperm.slane %v2225, 6
    %v2243 = vperm.slane %v2225, 7
    %v2260 = vsub.f32 %v2139, %v2228
    %v2261 = vsub.f32 %v2141, %v2229
    %v2262 = vsub.f32 %v2143, %v2230
    %v2263 = vsub.f32 %v2145, %v2231
    %v2264 = vsub.f32 %v2147, %v2232
    %v2265 = vsub.f32 %v2149, %v2233
    %v2266 = vsub.f32 %v2151, %v2234
    %v2267 = vsub.f32 %v2153, %v2235
    %v2268 = vsub.f32 %v2155, %v2236
    %v2269 = vsub.f32 %v2157, %v2237
    %v2270 = vsub.f32 %v2159, %v2238
    %v2271 = vsub.f32 %v2161, %v2239
    %v2272 = vsub.f32 %v2163, %v2240
    %v2273 = vsub.f32 %v2165, %v2241
    %v2274 = vsub.f32 %v2167, %v2242
    %v2275 = vsub.f32 %v2169, %v2243
    %v2276 = vmul.f32 %v2260, 1.442695
    %v2277 = vpow.pop %v2276
    %v2278 = vmul.f32 %v2261, 1.442695
    %v2279 = vpow.pop %v2278
    %v2280 = vmul.f32 %v2262, 1.442695
    %v2281 = vpow.pop %v2280
    %v2282 = vmul.f32 %v2263, 1.442695
    %v2283 = vpow.pop %v2282
    %v2284 = vmul.f32 %v2264, 1.442695
    %v2285 = vpow.pop %v2284
    %v2286 = vmul.f32 %v2265, 1.442695
    %v2287 = vpow.pop %v2286
    %v2288 = vmul.f32 %v2266, 1.442695
    %v2289 = vpow.pop %v2288
    %v2290 = vmul.f32 %v2267, 1.442695
    %v2291 = vpow.pop %v2290
    %v2292 = vmul.f32 %v2268, 1.442695
    %v2293 = vpow.pop %v2292
    %v2294 = vmul.f32 %v2269, 1.442695
    %v2295 = vpow.pop %v2294
    %v2296 = vmul.f32 %v2270, 1.442695
    %v2297 = vpow.pop %v2296
    %v2298 = vmul.f32 %v2271, 1.442695
    %v2299 = vpow.pop %v2298
    %v2300 = vmul.f32 %v2272, 1.442695
    %v2301 = vpow.pop %v2300
    %v2302 = vmul.f32 %v2273, 1.442695
    %v2303 = vpow.pop %v2302
    %v2304 = vmul.f32 %v2274, 1.442695
    %v2305 = vpow.pop %v2304
    %v2306 = vmul.f32 %v2275, 1.442695
    %v2307 = vpow.pop %v2306
    %2324 = vset.pattern.permute.xlu0 0
    %2325 = vperm.xlu0 %2324, %v2277
    %v2326 = vpop.permute.xlu0 %2325
    %2327 = vset.pattern.permute.xlu0 0
    %2328 = vperm.xlu0 %2327, %v2279
    %v2329 = vpop.permute.xlu0 %2328
    %2330 = vset.pattern.permute.xlu0 0
    %2331 = vperm.xlu0 %2330, %v2281
    %v2332 = vpop.permute.xlu0 %2331
    %2333 = vset.pattern.permute.xlu0 0
    %2334 = vperm.xlu0 %2333, %v2283
    %v2335 = vpop.permute.xlu0 %2334
    %2336 = vset.pattern.permute.xlu0 0
    %2337 = vperm.xlu0 %2336, %v2285
    %v2338 = vpop.permute.xlu0 %2337
    %2339 = vset.pattern.permute.xlu0 0
    %2340 = vperm.xlu0 %2339, %v2287
    %v2341 = vpop.permute.xlu0 %2340
    %2342 = vset.pattern.permute.xlu0 0
    %2343 = vperm.xlu0 %2342, %v2289
    %v2344 = vpop.permute.xlu0 %2343
    %2345 = vset.pattern.permute.xlu0 0
    %2346 = vperm.xlu0 %2345, %v2291
    %v2347 = vpop.permute.xlu0 %2346
    %2348 = vset.pattern.permute.xlu0 0
    %2349 = vperm.xlu0 %2348, %v2293
    %v2350 = vpop.permute.xlu0 %2349
    %2351 = vset.pattern.permute.xlu0 0
    %2352 = vperm.xlu0 %2351, %v2295
    %v2353 = vpop.permute.xlu0 %2352
    %2354 = vset.pattern.permute.xlu0 0
    %2355 = vperm.xlu0 %2354, %v2297
    %v2356 = vpop.permute.xlu0 %2355
    %2357 = vset.pattern.permute.xlu0 0
    %2358 = vperm.xlu0 %2357, %v2299
    %v2359 = vpop.permute.xlu0 %2358
    %2360 = vset.pattern.permute.xlu0 0
    %2361 = vperm.xlu0 %2360, %v2301
    %v2362 = vpop.permute.xlu0 %2361
    %2363 = vset.pattern.permute.xlu0 0
    %2364 = vperm.xlu0 %2363, %v2303
    %v2365 = vpop.permute.xlu0 %2364
    %2366 = vset.pattern.permute.xlu0 0
    %2367 = vperm.xlu0 %2366, %v2305
    %v2368 = vpop.permute.xlu0 %2367
    %2369 = vset.pattern.permute.xlu0 0
    %2370 = vperm.xlu0 %2369, %v2307
    %v2371 = vpop.permute.xlu0 %2370
    %v2372 = vperm.slane %v2326, %v83
    %v2373 = vperm.slane %v2329, %v83
    %v2374 = vperm.slane %v2332, %v83
    %v2375 = vperm.slane %v2335, %v83
    %v2376 = vperm.slane %v2338, %v83
    %v2377 = vperm.slane %v2341, %v83
    %v2378 = vperm.slane %v2344, %v83
    %v2379 = vperm.slane %v2347, %v83
    %v2380 = vperm.slane %v2350, %v83
    %v2381 = vperm.slane %v2353, %v83
    %v2382 = vperm.slane %v2356, %v83
    %v2383 = vperm.slane %v2359, %v83
    %v2384 = vperm.slane %v2362, %v83
    %v2385 = vperm.slane %v2365, %v83
    %v2386 = vperm.slane %v2368, %v83
    %v2387 = vperm.slane %v2371, %v83
    %v2388 = vsel %vm218, %v2373, %v2372
    %v2389 = vsel %vm221, %v2374, %v2388
    %v2390 = vsel %vm224, %v2375, %v2389
    %v2391 = vsel %vm227, %v2376, %v2390
    %v2392 = vsel %vm230, %v2377, %v2391
    %v2393 = vsel %vm233, %v2378, %v2392
    %v2394 = vsel %vm2208, %v2379, %v2393
    %v2395 = vsel %vm218, %v2381, %v2380
    %v2396 = vsel %vm221, %v2382, %v2395
    %v2397 = vsel %vm224, %v2383, %v2396
    %v2398 = vsel %vm227, %v2384, %v2397
    %v2399 = vsel %vm230, %v2385, %v2398
    %v2400 = vsel %vm233, %v2386, %v2399
    %v2401 = vsel %vm2208, %v2387, %v2400
    %v2404 = vsel %vm2219, %v2394, 0.0
    %2405 = vadd.xlane.f32.xlu0 %v2404
    %v2406 = vpop.xlane.xlu0 %2405
    %v2407 = vsel %vm2219, %v2401, 0.0
    %2408 = vadd.xlane.f32.xlu0 %v2407
    %v2409 = vpop.xlane.xlu0 %2408
    %v2410 = vrcp.pop %v2406
    %v2411 = vrcp.pop %v2409
    %v2414 = vperm.slane %v2410, 0
    %v2415 = vperm.slane %v2410, 1
    %v2416 = vperm.slane %v2410, 2
    %v2417 = vperm.slane %v2410, 3
    %v2418 = vperm.slane %v2410, 4
    %v2419 = vperm.slane %v2410, 5
    %v2420 = vperm.slane %v2410, 6
    %v2421 = vperm.slane %v2410, 7
    %v2422 = vperm.slane %v2411, 0
    %v2423 = vperm.slane %v2411, 1
    %v2424 = vperm.slane %v2411, 2
    %v2425 = vperm.slane %v2411, 3
    %v2426 = vperm.slane %v2411, 4
    %v2427 = vperm.slane %v2411, 5
    %v2428 = vperm.slane %v2411, 6
    %v2429 = vperm.slane %v2411, 7
    %v2446 = vmul.f32 %v2277, %v2414
    %v2447 = vmul.f32 %v2279, %v2415
    %v2448 = vmul.f32 %v2281, %v2416
    %v2449 = vmul.f32 %v2283, %v2417
    %v2450 = vmul.f32 %v2285, %v2418
    %v2451 = vmul.f32 %v2287, %v2419
    %v2452 = vmul.f32 %v2289, %v2420
    %v2453 = vmul.f32 %v2291, %v2421
    %v2454 = vmul.f32 %v2293, %v2422
    %v2455 = vmul.f32 %v2295, %v2423
    %v2456 = vmul.f32 %v2297, %v2424
    %v2457 = vmul.f32 %v2299, %v2425
    %v2458 = vmul.f32 %v2301, %v2426
    %v2459 = vmul.f32 %v2303, %v2427
    %v2460 = vmul.f32 %v2305, %v2428
    %v2461 = vmul.f32 %v2307, %v2429
    %2463 = vset.pattern.permute.xlu0 0
    %2464 = vperm.xlu0 %2463, %v2446
    %v2465 = vpop.permute.xlu0 %2464
    %2468 = vset.pattern.permute.xlu0 0
    %2469 = vperm.xlu0 %2468, %v2447
    %v2470 = vpop.permute.xlu0 %2469
    %2473 = vset.pattern.permute.xlu0 0
    %2474 = vperm.xlu0 %2473, %v2448
    %v2475 = vpop.permute.xlu0 %2474
    %2478 = vset.pattern.permute.xlu0 0
    %2479 = vperm.xlu0 %2478, %v2449
    %v2480 = vpop.permute.xlu0 %2479
    %2483 = vset.pattern.permute.xlu0 0
    %2484 = vperm.xlu0 %2483, %v2450
    %v2485 = vpop.permute.xlu0 %2484
    %2488 = vset.pattern.permute.xlu0 0
    %2489 = vperm.xlu0 %2488, %v2451
    %v2490 = vpop.permute.xlu0 %2489
    %2493 = vset.pattern.permute.xlu0 0
    %2494 = vperm.xlu0 %2493, %v2452
    %v2495 = vpop.permute.xlu0 %2494
    %2498 = vset.pattern.permute.xlu0 0
    %2499 = vperm.xlu0 %2498, %v2453
    %v2500 = vpop.permute.xlu0 %2499
    %2503 = vset.pattern.permute.xlu0 0
    %2504 = vperm.xlu0 %2503, %v2454
    %v2505 = vpop.permute.xlu0 %2504
    %2508 = vset.pattern.permute.xlu0 0
    %2509 = vperm.xlu0 %2508, %v2455
    %v2510 = vpop.permute.xlu0 %2509
    %2513 = vset.pattern.permute.xlu0 0
    %2514 = vperm.xlu0 %2513, %v2456
    %v2515 = vpop.permute.xlu0 %2514
    %2518 = vset.pattern.permute.xlu0 0
    %2519 = vperm.xlu0 %2518, %v2457
    %v2520 = vpop.permute.xlu0 %2519
    %2523 = vset.pattern.permute.xlu0 0
    %2524 = vperm.xlu0 %2523, %v2458
    %v2525 = vpop.permute.xlu0 %2524
    %2528 = vset.pattern.permute.xlu0 0
    %2529 = vperm.xlu0 %2528, %v2459
    %v2530 = vpop.permute.xlu0 %2529
    %2533 = vset.pattern.permute.xlu0 0
    %2534 = vperm.xlu0 %2533, %v2460
    %v2535 = vpop.permute.xlu0 %2534
    %2538 = vset.pattern.permute.xlu0 0
    %2539 = vperm.xlu0 %2538, %v2461
    %v2540 = vpop.permute.xlu0 %2539
    %v2542 = vmul.f32 %v2465, %v1974
    %v2543 = vmul.f32 %v2470, %v1977
    %v2544 = vmul.f32 %v2475, %v1980
    %v2545 = vmul.f32 %v2480, %v1983
    %v2546 = vmul.f32 %v2485, %v1986
    %v2547 = vmul.f32 %v2490, %v1989
    %v2548 = vmul.f32 %v2495, %v1992
    %v2549 = vmul.f32 %v2500, %v1995
    %v2550 = vmul.f32 %v2505, %v1998
    %v2551 = vmul.f32 %v2510, %v2001
    %v2552 = vmul.f32 %v2515, %v2004
    %v2553 = vmul.f32 %v2520, %v2007
    %v2554 = vmul.f32 %v2525, %v2010
    %v2555 = vmul.f32 %v2530, %v2013
    %v2556 = vmul.f32 %v2535, %v2016
    %v2557 = vmul.f32 %v2540, %v2019
    %v2558 = vrot.slane %v2542, 4
    %v2559 = vadd.f32 %v2542, %v2558
    %v2560 = vrot.slane %v2559, 2
    %v2561 = vadd.f32 %v2559, %v2560
    %v2562 = vrot.slane %v2561, 1
    %v2563 = vadd.f32 %v2561, %v2562
    %v2564 = vrot.slane %v2543, 4
    %v2565 = vadd.f32 %v2543, %v2564
    %v2566 = vrot.slane %v2565, 2
    %v2567 = vadd.f32 %v2565, %v2566
    %v2568 = vrot.slane %v2567, 1
    %v2569 = vadd.f32 %v2567, %v2568
    %v2570 = vrot.slane %v2544, 4
    %v2571 = vadd.f32 %v2544, %v2570
    %v2572 = vrot.slane %v2571, 2
    %v2573 = vadd.f32 %v2571, %v2572
    %v2574 = vrot.slane %v2573, 1
    %v2575 = vadd.f32 %v2573, %v2574
    %v2576 = vrot.slane %v2545, 4
    %v2577 = vadd.f32 %v2545, %v2576
    %v2578 = vrot.slane %v2577, 2
    %v2579 = vadd.f32 %v2577, %v2578
    %v2580 = vrot.slane %v2579, 1
    %v2581 = vadd.f32 %v2579, %v2580
    %v2582 = vrot.slane %v2546, 4
    %v2583 = vadd.f32 %v2546, %v2582
    %v2584 = vrot.slane %v2583, 2
    %v2585 = vadd.f32 %v2583, %v2584
    %v2586 = vrot.slane %v2585, 1
    %v2587 = vadd.f32 %v2585, %v2586
    %v2588 = vrot.slane %v2547, 4
    %v2589 = vadd.f32 %v2547, %v2588
    %v2590 = vrot.slane %v2589, 2
    %v2591 = vadd.f32 %v2589, %v2590
    %v2592 = vrot.slane %v2591, 1
    %v2593 = vadd.f32 %v2591, %v2592
    %v2594 = vrot.slane %v2548, 4
    %v2595 = vadd.f32 %v2548, %v2594
    %v2596 = vrot.slane %v2595, 2
    %v2597 = vadd.f32 %v2595, %v2596
    %v2598 = vrot.slane %v2597, 1
    %v2599 = vadd.f32 %v2597, %v2598
    %v2600 = vrot.slane %v2549, 4
    %v2601 = vadd.f32 %v2549, %v2600
    %v2602 = vrot.slane %v2601, 2
    %v2603 = vadd.f32 %v2601, %v2602
    %v2604 = vrot.slane %v2603, 1
    %v2605 = vadd.f32 %v2603, %v2604
    %v2606 = vrot.slane %v2550, 4
    %v2607 = vadd.f32 %v2550, %v2606
    %v2608 = vrot.slane %v2607, 2
    %v2609 = vadd.f32 %v2607, %v2608
    %v2610 = vrot.slane %v2609, 1
    %v2611 = vadd.f32 %v2609, %v2610
    %v2612 = vrot.slane %v2551, 4
    %v2613 = vadd.f32 %v2551, %v2612
    %v2614 = vrot.slane %v2613, 2
    %v2615 = vadd.f32 %v2613, %v2614
    %v2616 = vrot.slane %v2615, 1
    %v2617 = vadd.f32 %v2615, %v2616
    %v2618 = vrot.slane %v2552, 4
    %v2619 = vadd.f32 %v2552, %v2618
    %v2620 = vrot.slane %v2619, 2
    %v2621 = vadd.f32 %v2619, %v2620
    %v2622 = vrot.slane %v2621, 1
    %v2623 = vadd.f32 %v2621, %v2622
    %v2624 = vrot.slane %v2553, 4
    %v2625 = vadd.f32 %v2553, %v2624
    %v2626 = vrot.slane %v2625, 2
    %v2627 = vadd.f32 %v2625, %v2626
    %v2628 = vrot.slane %v2627, 1
    %v2629 = vadd.f32 %v2627, %v2628
    %v2630 = vrot.slane %v2554, 4
    %v2631 = vadd.f32 %v2554, %v2630
    %v2632 = vrot.slane %v2631, 2
    %v2633 = vadd.f32 %v2631, %v2632
    %v2634 = vrot.slane %v2633, 1
    %v2635 = vadd.f32 %v2633, %v2634
    %v2636 = vrot.slane %v2555, 4
    %v2637 = vadd.f32 %v2555, %v2636
    %v2638 = vrot.slane %v2637, 2
    %v2639 = vadd.f32 %v2637, %v2638
    %v2640 = vrot.slane %v2639, 1
    %v2641 = vadd.f32 %v2639, %v2640
    %v2642 = vrot.slane %v2556, 4
    %v2643 = vadd.f32 %v2556, %v2642
    %v2644 = vrot.slane %v2643, 2
    %v2645 = vadd.f32 %v2643, %v2644
    %v2646 = vrot.slane %v2645, 1
    %v2647 = vadd.f32 %v2645, %v2646
    %v2648 = vrot.slane %v2557, 4
    %v2649 = vadd.f32 %v2557, %v2648
    %v2650 = vrot.slane %v2649, 2
    %v2651 = vadd.f32 %v2649, %v2650
    %v2652 = vrot.slane %v2651, 1
    %v2653 = vadd.f32 %v2651, %v2652
    %v2670 = vsel %vm218, %v2569, %v2563
    %v2671 = vsel %vm221, %v2575, %v2670
    %v2672 = vsel %vm224, %v2581, %v2671
    %v2673 = vsel %vm227, %v2587, %v2672
    %v2674 = vsel %vm230, %v2593, %v2673
    %v2675 = vsel %vm233, %v2599, %v2674
    %v2676 = vsel %vm2208, %v2605, %v2675
    %v2677 = vsel %vm218, %v2617, %v2611
    %v2678 = vsel %vm221, %v2623, %v2677
    %v2679 = vsel %vm224, %v2629, %v2678
    %v2680 = vsel %vm227, %v2635, %v2679
    %v2681 = vsel %vm230, %v2641, %v2680
    %v2682 = vsel %vm233, %v2647, %v2681
    %v2683 = vsel %vm2208, %v2653, %v2682
    %2686 = vst [vmem:[#allocation7] sm:$0xff] %v2676
    %2687 = vst [vmem:[#allocation7 + $0x8] sm:$0xff] %v2683
    // Predicated region
    $region26: #{tpu_custom_call.1} parent=1 // pred_check
      _
    $region27: #{tpu_custom_call.1} parent=1 // pred_check_branch
      %2689 = sbr.rel (0) target = $region29
    $region28: #{tpu_custom_call.1} parent=1 // pred_region
      %2691 = vsyncadd [#allocation4], 0
      %s2692 = sshll.u32 [#allocation7], 4
      %s2693 = int_to_ptr.vmem [resolvable:$true] %s2692
      %s2694 = sshll.u32 %s4, 4
      %s2695 = int_to_ptr.hbm [resolvable:$true] %s2694
      %2700 = dma.vmem_to_hbm [thread:$0]  %s2693, 256, %s2695, [#allocation4], 128, 128, 8
    $region29: #{tpu_custom_call.1} parent=1 // pred_fallthru
      _
    // Predicated region
    $region30: #{tpu_custom_call.1} parent=1 // pred_check
      _
    $region31: #{tpu_custom_call.1} parent=1 // pred_check_branch
      %2702 = sbr.rel (0) target = $region33
    $region32: #{tpu_custom_call.1} parent=1 // pred_region
      %2704 = dma.done [#allocation4], 256
    $region33: #{tpu_custom_call.1} parent=1 // pred_fallthru
      _
    %2705 = vsyncpa [#allocation3], 1
    %2706 = vsyncpa [#allocation6], 1
    %2707 = vsyncpa [#allocation4], 1

</llo_original>
